<compile_context>
chip_gen: v5e
topology: v5e:2x2
jax: 0.10.0
libtpu: 0.0.40
codegen_flags: <defaults>
</compile_context>

<pallas_src>
import math
from functools import partial

import jax
import jax.numpy as jnp
from jax.experimental import pallas as pl
from jax.experimental.pallas import tpu as pltpu


# ----------------------------------------------------------------------------
# Parameter construction (deterministic, synthetic stand-ins for escnn bases)
# ----------------------------------------------------------------------------
def kernel_size_from_radius(radius: float) -> int:
    # TODO(synk): assumed odd kernel covering +/- radius: 2*ceil(radius)+1.
    return 2 * math.ceil(radius) + 1


def gaussian_kernel_1d(sigma: float, ksize: int) -> jnp.ndarray:
    r = (ksize - 1) / 2.0
    x = jnp.arange(ksize, dtype=jnp.float32) - r
    k = jnp.exp(-0.5 * (x / sigma) ** 2)
    return k / k.sum()


def blur_matrix_1d(n_in: int, k1d: jnp.ndarray, stride: int, pad: int) -> jnp.ndarray:
    """Banded matrix M [n_out, n_in] s.t. M @ v == conv1d(v, k1d, stride, zero-pad)."""
    ksize = k1d.shape[0]
    n_out = (n_in + 2 * pad - ksize) // stride + 1
    o = jnp.arange(n_out)[:, None]
    i = jnp.arange(n_in)[None, :]
    t = i - (o * stride - pad)                      # tap index into k1d
    valid = (t >= 0) & (t < ksize)
    return jnp.where(valid, k1d[jnp.clip(t, 0, ksize - 1)], 0.0).astype(jnp.float32)


# ----------------------------------------------------------------------------
# Tiling heuristics
# ----------------------------------------------------------------------------
def _pick_batch_tile(BC: int, cap: int = 8) -> int:
    """Largest divisor of BC (<= cap) that still leaves >= 2 parallel grid steps."""
    best = 1
    for tb in range(1, min(BC, cap) + 1):
        if BC % tb:
            continue
        if BC // tb < 2 and BC != 1:
            continue
        best = tb
    return best


def _pick_chunk(DHW: int, target: int = 1024) -> int:
    """Spatial reduction chunk: largest multiple of 128 <= target dividing DHW."""
    if DHW <= target:
        return DHW
    for ck in range(target, 127, -128):
        if DHW % ck == 0:
            return ck
    return DHW


# ----------------------------------------------------------------------------
# Fused Pallas kernel:  out = kron(I,Aft) @ [ (kron(I,Aift) @ X) @ McorrT ]
#   grid = (batch_tiles, spatial_chunks);  spatial chunk axis is the reduction.
# ----------------------------------------------------------------------------
def _fused_kernel(ift_ref, mT_ref, ft_ref, x_ref, o_ref, z_ref):
    k = pl.program_id(1)

    @pl.when(k == 0)
    def _():
        z_ref[...] = jnp.zeros_like(z_ref)

    # IFT on this spatial chunk:  [TB*G, TB*F] @ [TB*F, CK] -> [TB*G, CK] (f32 acc)
    y = jnp.dot(ift_ref[...], x_ref[...], preferred_element_type=jnp.float32)

    # Strided blur + edge correction (folded into mT):  accumulate over chunks.
    z_ref[...] += jnp.dot(y.astype(jnp.bfloat16), mT_ref[...],
                          preferred_element_type=jnp.float32)

    @pl.when(k == pl.num_programs(1) - 1)
    def _():
        # FT back to Fourier coefficients: [TB*F, TB*G] @ [TB*G, M] -> [TB*F, M]
        o_ref[...] = jnp.dot(ft_ref[...], z_ref[...].astype(jnp.bfloat16),
                             preferred_element_type=jnp.float32).astype(o_ref.dtype)


# ----------------------------------------------------------------------------
# FourierAvgPool3D forward
# ----------------------------------------------------------------------------
def fourier_avg_pool_3d(x_hat, a_ift, a_ft, k1d, *, c, stride):
    B, CF, D, H, W = x_hat.shape
    G, F = a_ift.shape
    assert CF == c * F
    BC = B * c
    DHW = D * H * W
    ksize = k1d.shape[0]
    pad = ksize // 2

    # 1D blur matrices and the collapsed 3D blur matrix with edge correction folded in.
    Mz = blur_matrix_1d(D, k1d, stride, pad)
    My = blur_matrix_1d(H, k1d, stride, pad)
    Mx = blur_matrix_1d(W, k1d, stride, pad)
    Do, Ho, Wo = Mz.shape[0], My.shape[0], Mx.shape[0]
    M = Do * Ho * Wo
    Mfull = jnp.kron(Mz, jnp.kron(My, Mx))                       # [M, DHW]
    Mcorr = Mfull / Mfull.sum(axis=1, keepdims=True)             # edge correction
    mT = Mcorr.T.astype(jnp.bfloat16)                            # [DHW, M]

    # Batch tile and spatial chunk sizes.
    TB = _pick_batch_tile(BC)
    CK = _pick_chunk(DHW)
    nbt, nck = BC // TB, DHW // CK

    # Block-diagonal IFT / FT matrices so each contraction is one 2-D MXU matmul.
    eye = jnp.eye(TB, dtype=jnp.float32)
    big_ift = jnp.kron(eye, a_ift).astype(jnp.bfloat16)          # [TB*G, TB*F]
    big_ft = jnp.kron(eye, a_ft).astype(jnp.bfloat16)            # [TB*F, TB*G]

    # Flatten to 2-D slabs: rows = (b, c, f) major->minor, lanes = spatial.
    x = x_hat.reshape(BC * F, DHW).astype(jnp.bfloat16)

    # NOTE: out last dim = Do*Ho*Wo; lane-dense (unmasked stores) when it is a
    # multiple of 128 (true for the demo sizes below).
    out = pl.pallas_call(
        _fused_kernel,
        out_shape=jax.ShapeDtypeStruct((BC * F, M), jnp.float32),
        grid_spec=pltpu.PrefetchScalarGridSpec(
            num_scalar_prefetch=0,
            grid=(nbt, nck),
            in_specs=[
                pl.BlockSpec((TB * G, TB * F), lambda i, k: (0, 0)),   # kron(I, Aift)
                pl.BlockSpec((CK, M), lambda i, k: (k, 0)),            # blur matrix chunk
                pl.BlockSpec((TB * F, TB * G), lambda i, k: (0, 0)),   # kron(I, Aft)
                pl.BlockSpec((TB * F, CK), lambda i, k: (i, k)),       # x chunk
            ],
            out_specs=pl.BlockSpec((TB * F, M), lambda i, k: (i, 0)),
            scratch_shapes=[pltpu.VMEM((TB * G, M), jnp.float32)],     # blur accumulator
        ),
        compiler_params=pltpu.CompilerParams(
            dimension_semantics=("parallel", "arbitrary"),
            vmem_limit_bytes=48 * 1024 * 1024,
        ),
    )(big_ift, mT, big_ft, x)

    return out.reshape(B, c * F, Do, Ho, Wo)


# ----------------------------------------------------------------------------
# Pure-JAX f32 reference for correctness checking
# ----------------------------------------------------------------------------
def reference(x_hat, a_ift, a_ft, k1d, *, c, stride):
    B, CF, D, H, W = x_hat.shape
    G, F = a_ift.shape
    ksize = k1d.shape[0]
    pad = ksize // 2
    Mz = blur_matrix_1d(D, k1d, stride, pad)
    My = blur_matrix_1d(H, k1d, stride, pad)
    Mx = blur_matrix_1d(W, k1d, stride, pad)
    xh = x_hat.reshape(B, c, F, D, H, W)
    y = jnp.einsum('gf,bcfdhw->bcgdhw', a_ift, xh)
    z = jnp.einsum('bcgdhw,od,ph,qw->bcgopq', y, Mz, My, Mx)
    norm = jnp.einsum('o,p,q->opq', Mz.sum(1), My.sum(1), Mx.sum(1))
    z = z / norm
    out = jnp.einsum('fg,bcgopq->bcfopq', a_ft, z)
    return out.reshape(B, c * F, *z.shape[-3:])


if __name__ == "__main__":
    key = jax.random.PRNGKey(0)
    k1, k2, k3 = jax.random.split(key, 3)

    # Module-consistent small sizes: B=2 batches, C=2 field channels, F=8 Fourier
    # coeffs per channel, G=12 grid elements, spatial 16^3 (stride 2 -> 8^3 out,
    # so the output lane dim is 512 = lane-dense).
    B, C, F, G = 2, 2, 8, 12
    D = H = W = 16
    stride, sigma = 2, 0.6

    ksize = kernel_size_from_radius(sigma * 4)
    k1d = gaussian_kernel_1d(sigma, ksize)

    # Synthetic deterministic IFT / FT projection matrices (stand-ins for the
    # escnn Fourier basis matrices; shapes are what the module implies).
    a_ift = jax.random.normal(k1, (G, F), jnp.float32) / jnp.sqrt(F)
    a_ft = jax.random.normal(k2, (F, G), jnp.float32) / jnp.sqrt(G)

    x_hat = jax.random.normal(k3, (B, C * F, D, H, W), jnp.float32)

    fwd = jax.jit(partial(fourier_avg_pool_3d, c=C, stride=stride))
    out = jax.block_until_ready(fwd(x_hat, a_ift, a_ft, k1d))

    ref = reference(x_hat, a_ift, a_ft, k1d, c=C, stride=stride)
    assert out.shape == ref.shape, (out.shape, ref.shape)
    assert bool(jnp.all(jnp.isfinite(out)))
    rel_err = jnp.linalg.norm(out - ref) / jnp.linalg.norm(ref)
    # bf16 MXU operands (f32 accumulation) through three chained projections vs
    # a pure-f32 reference: allow 3e-2 relative Frobenius error.
    assert float(rel_err) < 3e-2, float(rel_err)
    print("KERNEL_OK")
</pallas_src>

<mosaic_0001>
module attributes {stable_mosaic.version = 11 : i64} {
  func.func @_fused_kernel(%arg0: i32, %arg1: i32, %arg2: memref<24x16xbf16, #tpu.memory_space<vmem>>, %arg3: memref<1024x512xbf16, #tpu.memory_space<vmem>>, %arg4: memref<16x24xbf16, #tpu.memory_space<vmem>>, %arg5: memref<16x1024xbf16, #tpu.memory_space<vmem>>, %arg6: memref<16x512xf32, #tpu.memory_space<vmem>>, %arg7: memref<24x512xf32, #tpu.memory_space<vmem>>) attributes {dimension_semantics = [#tpu.dimension_semantics<parallel>, #tpu.dimension_semantics<arbitrary>], iteration_bounds = array<i64: 2, 4>, scalar_prefetch = 0 : i64, scratch_operands = 1 : i64, tpu.core_type = #tpu.core_type<tc>, window_params = [{pipeline_mode = #tpu.pipeline_mode<synchronous>, transform_indices = @transform_0, window_bounds = array<i64: 24, 16>}, {transform_indices = @transform_1, window_bounds = array<i64: 1024, 512>}, {pipeline_mode = #tpu.pipeline_mode<synchronous>, transform_indices = @transform_2, window_bounds = array<i64: 16, 24>}, {transform_indices = @transform_3, window_bounds = array<i64: 16, 1024>}, {transform_indices = @transform_4, window_bounds = array<i64: 16, 512>}]} {
    %c0_i32 = arith.constant 0 : i32
    %0 = arith.cmpi eq, %arg1, %c0_i32 : i32
    %1 = arith.extui %0 : i1 to i32
    %c0_i32_0 = arith.constant 0 : i32
    %2 = arith.cmpi ne, %1, %c0_i32_0 : i32
    scf.if %2 {
      %cst_12 = arith.constant 0.000000e+00 : f32
      %15 = vector.broadcast %cst_12 : f32 to vector<24x512xf32>
      %c0_13 = arith.constant 0 : index
      %c0_14 = arith.constant 0 : index
      %16 = vector.load %arg7[%c0_13, %c0_14] : memref<24x512xf32, #tpu.memory_space<vmem>>, vector<24x512xf32>
      tpu.vector_store %arg7[%c0_13, %c0_14], %15 {strides = array<i32>} : memref<24x512xf32, #tpu.memory_space<vmem>>, vector<24x512xf32>,
    } else {
    }
    %c0 = arith.constant 0 : index
    %c0_1 = arith.constant 0 : index
    %3 = vector.load %arg2[%c0, %c0_1] : memref<24x16xbf16, #tpu.memory_space<vmem>>, vector<24x16xbf16>
    %c0_2 = arith.constant 0 : index
    %c0_3 = arith.constant 0 : index
    %4 = vector.load %arg5[%c0_2, %c0_3] : memref<16x1024xbf16, #tpu.memory_space<vmem>>, vector<16x1024xbf16>
    %cst = arith.constant dense<0.000000e+00> : vector<24x1024xf32>
    %5 = tpu.matmul %3, %4, %cst {dimension_numbers = #tpu.dot_dimension_numbers<[1], [0], [0], [1], [0, 0, 1, 1], [], []>} : vector<24x16xbf16>, vector<16x1024xbf16>, vector<24x1024xf32> -> vector<24x1024xf32>
    %c0_4 = arith.constant 0 : index
    %c0_5 = arith.constant 0 : index
    %6 = vector.load %arg7[%c0_4, %c0_5] : memref<24x512xf32, #tpu.memory_space<vmem>>, vector<24x512xf32>
    %7 = arith.truncf %5 : vector<24x1024xf32> to vector<24x1024xbf16>
    %c0_6 = arith.constant 0 : index
    %c0_7 = arith.constant 0 : index
    %8 = vector.load %arg3[%c0_6, %c0_7] : memref<1024x512xbf16, #tpu.memory_space<vmem>>, vector<1024x512xbf16>
    %cst_8 = arith.constant dense<0.000000e+00> : vector<24x512xf32>
    %9 = tpu.matmul %7, %8, %cst_8 {dimension_numbers = #tpu.dot_dimension_numbers<[1], [0], [0], [1], [0, 0, 1, 1], [], []>} : vector<24x1024xbf16>, vector<1024x512xbf16>, vector<24x512xf32> -> vector<24x512xf32>
    %10 = arith.addf %6, %9 : vector<24x512xf32>
    %c0_9 = arith.constant 0 : index
    %c0_10 = arith.constant 0 : index
    %11 = vector.load %arg7[%c0_9, %c0_10] : memref<24x512xf32, #tpu.memory_space<vmem>>, vector<24x512xf32>
    tpu.vector_store %arg7[%c0_9, %c0_10], %10 {strides = array<i32>} : memref<24x512xf32, #tpu.memory_space<vmem>>, vector<24x512xf32>,
    %c3_i32 = arith.constant 3 : i32
    %12 = arith.cmpi eq, %arg1, %c3_i32 : i32
    %13 = arith.extui %12 : i1 to i32
    %c0_i32_11 = arith.constant 0 : i32
    %14 = arith.cmpi ne, %13, %c0_i32_11 : i32
    scf.if %14 {
      %c0_12 = arith.constant 0 : index
      %c0_13 = arith.constant 0 : index
      %15 = vector.load %arg4[%c0_12, %c0_13] : memref<16x24xbf16, #tpu.memory_space<vmem>>, vector<16x24xbf16>
      %c0_14 = arith.constant 0 : index
      %c0_15 = arith.constant 0 : index
      %16 = vector.load %arg7[%c0_14, %c0_15] : memref<24x512xf32, #tpu.memory_space<vmem>>, vector<24x512xf32>
      %17 = arith.truncf %16 : vector<24x512xf32> to vector<24x512xbf16>
      %cst_16 = arith.constant dense<0.000000e+00> : vector<16x512xf32>
      %18 = tpu.matmul %15, %17, %cst_16 {dimension_numbers = #tpu.dot_dimension_numbers<[1], [0], [0], [1], [0, 0, 1, 1], [], []>} : vector<16x24xbf16>, vector<24x512xbf16>, vector<16x512xf32> -> vector<16x512xf32>
      %c0_17 = arith.constant 0 : index
      %c0_18 = arith.constant 0 : index
      %19 = vector.load %arg6[%c0_17, %c0_18] : memref<16x512xf32, #tpu.memory_space<vmem>>, vector<16x512xf32>
      tpu.vector_store %arg6[%c0_17, %c0_18], %18 {strides = array<i32>} : memref<16x512xf32, #tpu.memory_space<vmem>>, vector<16x512xf32>,
    } else {
    }
    return
  }
  func.func @transform_0(%arg0: i32, %arg1: i32) -> (i32, i32) {
    %c0_i32 = arith.constant 0 : i32
    %c0_i32_0 = arith.constant 0 : i32
    %c0_i32_1 = arith.constant 0 : i32
    return %c0_i32, %c0_i32_0 : i32, i32
  }
  func.func @transform_1(%arg0: i32, %arg1: i32) -> (i32, i32) {
    %c0_i32 = arith.constant 0 : i32
    %c0_i32_0 = arith.constant 0 : i32
    return %arg1, %c0_i32 : i32, i32
  }
  func.func @transform_2(%arg0: i32, %arg1: i32) -> (i32, i32) {
    %c0_i32 = arith.constant 0 : i32
    %c0_i32_0 = arith.constant 0 : i32
    %c0_i32_1 = arith.constant 0 : i32
    return %c0_i32, %c0_i32_0 : i32, i32
  }
  func.func @transform_3(%arg0: i32, %arg1: i32) -> (i32, i32) {
    %c0_i32 = arith.constant 0 : i32
    return %arg0, %arg1 : i32, i32
  }
  func.func @transform_4(%arg0: i32, %arg1: i32) -> (i32, i32) {
    %c0_i32 = arith.constant 0 : i32
    %c0_i32_0 = arith.constant 0 : i32
    return %arg0, %c0_i32 : i32, i32
  }
}

</mosaic_0001>

<llo_original>
// kernel: div.5
$region0: #{div.5}
  %s0 = inlined_call_operand.vmem [shape: f32[8,64], index: 0, kind: input, shape index: {}]
  %s1 = inlined_call_operand.vmem [shape: f32[512], index: 1, kind: output, shape index: {}]
  $region1: #{div.5} parent=0
    #allocation0 [shape = 'u8[4096]{0}', space=vmem, size = 0x1000, scoped, tag = 'scoped mem for output reshape']
    %v2 = vld [vmem:[%s0] ss:$2 sm:$0xf]
    %vm3 = vcmask 523264
    %4 = vst.msk [vmem:[#allocation0] sm:$0xf] %vm3, %v2
    %s5 = scalar_lea.vmem %s0, 1
    %v6 = vld [vmem:[%s5] ss:$2 sm:$0xf]
    %7 = vrot.lane.b32.xlu0 %v6, 64
    %v8 = vpop.permute.xlu0 %7
    %vm9 = vcmask 1048064
    %10 = vst.msk [vmem:[#allocation0] sm:$0xf] %vm9, %v8
    %s12 = ssub.s32 16, 1
    %v13 = vld [vmem:[#allocation0] sm:%s12]
    %s15 = ssub.s32 16, 1
    %16 = vst [vmem:[%s1] sm:%s15] %v13

// kernel: fourier_avg_pool_3d.1
$region0: #{fourier_avg_pool_3d.1}
  #allocation0 [shape = 'u32[]', space=smem, size = 0x4, offset = 0x4, fixed_abs, tag = 'smem constant byte address 0x4 - core index']
  #allocation1 [shape = 'u32[72,128]{1,0:T(1,128)}', space=vmem, size = 0x9000, scoped, tag = 'internal scratch']
  #allocation2 [shape = 'f32[24,512]{1,0:T(8,128)}', space=vmem, size = 0xc000, scoped, tag = 'scratch operand']
  %s0 = inlined_call_operand.vmem [shape: bf16[24,16], index: 0, kind: input, shape index: {}]
  %s1 = inlined_call_operand.vmem [shape: bf16[4096,512], index: 1, kind: input, shape index: {}]
  %s2 = inlined_call_operand.vmem [shape: bf16[16,24], index: 2, kind: input, shape index: {}]
  %s3 = inlined_call_operand.vmem [shape: bf16[32,4096], index: 3, kind: input, shape index: {}]
  %s4 = inlined_call_operand.vmem [shape: f32[32,512], index: 4, kind: output, shape index: {}]
  %s5 = sld [smem:[#allocation0]]
  $region80: #{fourier_avg_pool_3d.1} parent=0
    _
  %s7 = ssub.s32 1, %s5
  %s8 = scalar_select 0, %s7, %s5
  $region1: #{fourier_avg_pool_3d.1} parent=0
    #allocation3 [shape = 'u8[65536]{0}', space=vmem, size = 0x10000, scoped, tag = 'input window, operand 3']
    loop: start=0, step=1, limit=10
    $region2: #{fourier_avg_pool_3d.1} parent=1 // loop_pre_header
      _
    $region3: #{fourier_avg_pool_3d.1} parent=1 // loop_header
      %s10 = sphi 0, %s14
      %p11 = scmp.ge.s32.totalorder %s10, 10
      %s17 = sphi 0, %s29
      %s18 = sphi 0, %s25
      %s19 = sphi 0, %s17
      %s20 = sphi 0, %s18
      %s21 = sphi 0, %s19
      %s22 = sphi 0, %s20
      %s30 = sphi 0, %s30
      %s32 = sphi 0, %s30
      %s33 = sphi 0, %s32
      %s47 = sphi 0, %s33
      %s53 = sphi 0, %s55
      %s56 = sphi 0, %s53
      %s57 = sphi 0, %s56
      %s73 = sphi 0, %s57
      %s77 = sphi 0, %s77
      %s79 = sphi 0, %s77
      %s80 = sphi 0, %s79
      %s94 = sphi 0, %s80
      %s102 = sphi 0, %s104
      %s105 = sphi 0, %s102
      %s106 = sphi 0, %s105
      %s122 = sphi 0, %s106
      %s128 = sphi 0, %s130
      %s131 = sphi 0, %s128
      %s132 = sphi 0, %s131
      %s148 = sphi 0, %s132
    $region4: #{fourier_avg_pool_3d.1} parent=1 // loop_header_branch
      %13 = sbr.rel (%p11) target = $region8
    $region5: #{fourier_avg_pool_3d.1} parent=1 // loop_body
      %s15 = ssub.s32 %s10, 1
      %s16 = ssub.s32 %s10, 2
      %s23 = sadd.s32 1, %s18
      %p24 = scmp.ge.s32.totalorder %s23, 4
      %s25 = scalar_select %p24, 0, %s23
      %s26 = sadd.s32 1, %s17
      %s27 = scalar_select %p24, %s26, %s17
      %p28 = scmp.ge.s32.totalorder %s27, 2
      %s29 = scalar_select %p28, 0, %s27
      %s31 = sadd.s32 %s30, 1
      %p34 = scmp.eq.s32.totalorder %s10, 7
      %p35 = scmp.ne.s32.totalorder %s30, %s32
      %p36 = scmp.eq.s32.totalorder %s10, 0
      %p37 = por %p35, %p36
      %p38 = scmp.ne.s32.totalorder %s30, %s32
      %p39 = scmp.eq.s32.totalorder %s15, 7
      %p40 = por %p38, %p39
      %p41 = scmp.ne.s32.totalorder %s32, %s33
      %p42 = scmp.eq.s32.totalorder %s15, 0
      %p43 = por %p41, %p42
      %p44 = scmp.ne.s32.totalorder %s32, %s33
      %p45 = scmp.eq.s32.totalorder %s16, 7
      %p46 = por %p44, %p45
      %p48 = scmp.ne.s32.totalorder %s33, %s47
      %p49 = scmp.eq.s32.totalorder %s16, 0
      %p50 = por %p48, %p49
      %s51 = ssub.s32 %s18, %s25
      %p52 = scmp.eq.s32.totalorder %s51, 0
      %s54 = sadd.s32 %s53, 1
      %s55 = scalar_select %p52, %s53, %s54
      %p58 = pneg %p52
      %p59 = scmp.eq.s32.totalorder %s10, 7
      %p60 = por %p58, %p59
      %p61 = scmp.ne.s32.totalorder %s53, %s56
      %p62 = scmp.eq.s32.totalorder %s10, 0
      %p63 = por %p61, %p62
      %p64 = scmp.ne.s32.totalorder %s53, %s56
      %p65 = scmp.eq.s32.totalorder %s15, 7
      %p66 = por %p64, %p65
      %p67 = scmp.ne.s32.totalorder %s56, %s57
      %p68 = scmp.eq.s32.totalorder %s15, 0
      %p69 = por %p67, %p68
      %p70 = scmp.ne.s32.totalorder %s56, %s57
      %p71 = scmp.eq.s32.totalorder %s16, 7
      %p72 = por %p70, %p71
      %p74 = scmp.ne.s32.totalorder %s57, %s73
      %p75 = scmp.eq.s32.totalorder %s16, 0
      %p76 = por %p74, %p75
      %s78 = sadd.s32 %s77, 1
      %p81 = scmp.eq.s32.totalorder %s10, 7
      %p82 = scmp.ne.s32.totalorder %s77, %s79
      %p83 = scmp.eq.s32.totalorder %s10, 0
      %p84 = por %p82, %p83
      %p85 = scmp.ne.s32.totalorder %s77, %s79
      %p86 = scmp.eq.s32.totalorder %s15, 7
      %p87 = por %p85, %p86
      %p88 = scmp.ne.s32.totalorder %s79, %s80
      %p89 = scmp.eq.s32.totalorder %s15, 0
      %p90 = por %p88, %p89
      %p91 = scmp.ne.s32.totalorder %s79, %s80
      %p92 = scmp.eq.s32.totalorder %s16, 7
      %p93 = por %p91, %p92
      %p95 = scmp.ne.s32.totalorder %s80, %s94
      %p96 = scmp.eq.s32.totalorder %s16, 0
      %p97 = por %p95, %p96
      %s98 = ssub.s32 %s17, %s29
      %s99 = ssub.s32 %s18, %s25
      %s100 = sor.u32 %s98, %s99
      %p101 = scmp.eq.s32.totalorder %s100, 0
      %s103 = sadd.s32 %s102, 1
      %s104 = scalar_select %p101, %s102, %s103
      %p107 = pneg %p101
      %p108 = scmp.eq.s32.totalorder %s10, 7
      %p109 = por %p107, %p108
      %p110 = scmp.ne.s32.totalorder %s102, %s105
      %p111 = scmp.eq.s32.totalorder %s10, 0
      %p112 = por %p110, %p111
      %p113 = scmp.ne.s32.totalorder %s102, %s105
      %p114 = scmp.eq.s32.totalorder %s15, 7
      %p115 = por %p113, %p114
      %p116 = scmp.ne.s32.totalorder %s105, %s106
      %p117 = scmp.eq.s32.totalorder %s15, 0
      %p118 = por %p116, %p117
      %p119 = scmp.ne.s32.totalorder %s105, %s106
      %p120 = scmp.eq.s32.totalorder %s16, 7
      %p121 = por %p119, %p120
      %p123 = scmp.ne.s32.totalorder %s106, %s122
      %p124 = scmp.eq.s32.totalorder %s16, 0
      %p125 = por %p123, %p124
      %s126 = ssub.s32 %s17, %s29
      %p127 = scmp.eq.s32.totalorder %s126, 0
      %s129 = sadd.s32 %s128, 1
      %s130 = scalar_select %p127, %s128, %s129
      %p133 = pneg %p127
      %p134 = scmp.eq.s32.totalorder %s10, 7
      %p135 = por %p133, %p134
      %p136 = scmp.ne.s32.totalorder %s128, %s131
      %p137 = scmp.eq.s32.totalorder %s10, 0
      %p138 = por %p136, %p137
      %p139 = scmp.ne.s32.totalorder %s128, %s131
      %p140 = scmp.eq.s32.totalorder %s15, 7
      %p141 = por %p139, %p140
      %p142 = scmp.ne.s32.totalorder %s131, %s132
      %p143 = scmp.eq.s32.totalorder %s15, 0
      %p144 = por %p142, %p143
      %p145 = scmp.ne.s32.totalorder %s131, %s132
      %p146 = scmp.eq.s32.totalorder %s16, 7
      %p147 = por %p145, %p146
      %p149 = scmp.ne.s32.totalorder %s132, %s148
      %p150 = scmp.eq.s32.totalorder %s16, 0
      %p151 = por %p149, %p150
      %p152 = scmp.le.s32.totalorder 1, %s10
      %p153 = scmp.lt.s32.totalorder %s10, 9
      %p154 = pnand %p152, %p153
      %p155 = pneg %p154
      // Predicated region
      $region9: #{fourier_avg_pool_3d.1} parent=5 // pred_check
        _
      $region10: #{fourier_avg_pool_3d.1} parent=5 // pred_check_branch
        %157 = sbr.rel (%p154) target = $region12
      $region11: #{fourier_avg_pool_3d.1} parent=5 // pred_region
        %s158 = ssub.s32 %s10, 1
        // Predicated region
        $region13: #{fourier_avg_pool_3d.1} parent=11 // pred_check
          %p159 = pneg %p43
        $region14: #{fourier_avg_pool_3d.1} parent=11 // pred_check_branch
          %161 = sbr.rel (%p159) target = $region16
        $region15: #{fourier_avg_pool_3d.1} parent=11 // pred_region
          _
        $region16: #{fourier_avg_pool_3d.1} parent=11 // pred_fallthru
          _
        // Predicated region
        $region17: #{fourier_avg_pool_3d.1} parent=11 // pred_check
          %p162 = pneg %p90
        $region18: #{fourier_avg_pool_3d.1} parent=11 // pred_check_branch
          %164 = sbr.rel (%p162) target = $region20
        $region19: #{fourier_avg_pool_3d.1} parent=11 // pred_region
          _
        $region20: #{fourier_avg_pool_3d.1} parent=11 // pred_fallthru
          _
      $region12: #{fourier_avg_pool_3d.1} parent=5 // pred_fallthru
        _
      %p165 = scmp.lt.s32.totalorder %s10, 8
      // Predicated region
      $region21: #{fourier_avg_pool_3d.1} parent=5 // pred_check
        %p166 = pneg %p165
      $region22: #{fourier_avg_pool_3d.1} parent=5 // pred_check_branch
        %168 = sbr.rel (%p166) target = $region24
      $region23: #{fourier_avg_pool_3d.1} parent=5 // pred_region
        // Predicated region
        $region25: #{fourier_avg_pool_3d.1} parent=23 // pred_check
          %p169 = pneg %p63
        $region26: #{fourier_avg_pool_3d.1} parent=23 // pred_check_branch
          %171 = sbr.rel (%p169) target = $region28
        $region27: #{fourier_avg_pool_3d.1} parent=23 // pred_region
          %s172 = smul.u32 128, %s18
          %p173 = scmp.lt.s32.totalorder %s172, 511
          %s174 = scalar_select %p173, %s172, 511
          %s175 = smul.addr %s174, 4
          %s176 = smul.addr %s175, 4
          %s177 = scalar_lea.vmem %s1, %s176
          %s178 = smul.u32 128, %s18
        $region28: #{fourier_avg_pool_3d.1} parent=23 // pred_fallthru
          _
        // Predicated region
        $region29: #{fourier_avg_pool_3d.1} parent=23 // pred_check
          %p179 = pneg %p112
        $region30: #{fourier_avg_pool_3d.1} parent=23 // pred_check_branch
          %181 = sbr.rel (%p179) target = $region32
        $region31: #{fourier_avg_pool_3d.1} parent=23 // pred_region
          %s182 = sand.u32 %s102, 1
          %s183 = sand.u32 %s102, 1
          %s184 = smul.addr %s183, 64
          %s185 = scalar_lea.vmem [#allocation3], %s184
          %s186 = smul.u32 2, %s17
          %s187 = smul.u32 8, %s18
          %s188 = smul.addr %s186, 32
          %s189 = sadd.s32 %s187, %s188
          %s190 = smul.addr %s189, 4
          %s191 = scalar_lea.vmem %s3, %s190
          // Predicated region
          $region33: #{fourier_avg_pool_3d.1} parent=31 // pred_check
            _
          $region34: #{fourier_avg_pool_3d.1} parent=31 // pred_check_branch
            %193 = sbr.rel (0) target = $region36
          $region35: #{fourier_avg_pool_3d.1} parent=31 // pred_region
            // Predicated region
            $region37: #{fourier_avg_pool_3d.1} parent=35 // pred_check
              _
            $region38: #{fourier_avg_pool_3d.1} parent=35 // pred_check_branch
              %195 = sbr.rel (0) target = $region40
            $region39: #{fourier_avg_pool_3d.1} parent=35 // pred_region
              loop: start=0, step=1, limit=1
              $region41: #{fourier_avg_pool_3d.1} parent=39 // loop_pre_header
                _
              $region42: #{fourier_avg_pool_3d.1} parent=39 // loop_header
                %s197 = sphi 0, %s201
                %p198 = scmp.ge.s32.totalorder %s197, 1
                %s202 = sphi %s191, %s191
                %s203 = sphi %s185, %s185
              $region43: #{fourier_avg_pool_3d.1} parent=39 // loop_header_branch
                %200 = sbr.rel (%p198) target = $region47
              $region44: #{fourier_avg_pool_3d.1} parent=39 // loop_body
                %v204 = vld [vmem:[%s202] sm:$0xff]
                %205 = vst [vmem:[%s203] sm:$0xff] %v204
                %v206 = vld [vmem:[%s202 + $0x8] sm:$0xff]
                %207 = vst [vmem:[%s203 + $0x8] sm:$0xff] %v206
                %v208 = vld [vmem:[%s202 + $0x10] sm:$0xff]
                %209 = vst [vmem:[%s203 + $0x10] sm:$0xff] %v208
                %v210 = vld [vmem:[%s202 + $0x18] sm:$0xff]
                %211 = vst [vmem:[%s203 + $0x18] sm:$0xff] %v210
                %v212 = vld [vmem:[%s202 + $0x80] sm:$0xff]
                %213 = vst [vmem:[%s203 + $0x20] sm:$0xff] %v212
                %v214 = vld [vmem:[%s202 + $0x88] sm:$0xff]
                %215 = vst [vmem:[%s203 + $0x28] sm:$0xff] %v214
                %v216 = vld [vmem:[%s202 + $0x90] sm:$0xff]
                %217 = vst [vmem:[%s203 + $0x30] sm:$0xff] %v216
                %v218 = vld [vmem:[%s202 + $0x98] sm:$0xff]
                %219 = vst [vmem:[%s203 + $0x38] sm:$0xff] %v218
              $region45: #{fourier_avg_pool_3d.1} parent=39 // loop_footer
                %s201 = sadd.s32 1, %s197
              $region46: #{fourier_avg_pool_3d.1} parent=39 // loop_footer_branch
                %196 = sbr.rel target = $region42
              $region47: #{fourier_avg_pool_3d.1} parent=39 // loop_exit
                _
            $region40: #{fourier_avg_pool_3d.1} parent=35 // pred_fallthru
              _
            // Predicated region
            $region48: #{fourier_avg_pool_3d.1} parent=35 // pred_check
              _
            $region49: #{fourier_avg_pool_3d.1} parent=35 // pred_check_branch
              %221 = sbr.rel target = $region51
            $region50: #{fourier_avg_pool_3d.1} parent=35 // pred_region
              _
            $region51: #{fourier_avg_pool_3d.1} parent=35 // pred_fallthru
              _
          $region36: #{fourier_avg_pool_3d.1} parent=31 // pred_fallthru
            _
          %222 = vnop
        $region32: #{fourier_avg_pool_3d.1} parent=23 // pred_fallthru
          _
      $region24: #{fourier_avg_pool_3d.1} parent=5 // pred_fallthru
        _
      %p223 = scmp.le.s32.totalorder 1, %s10
      %p224 = scmp.lt.s32.totalorder %s10, 9
      %p225 = pnand %p223, %p224
      %p226 = pneg %p225
      // Predicated region
      $region52: #{fourier_avg_pool_3d.1} parent=5 // pred_check
        _
      $region53: #{fourier_avg_pool_3d.1} parent=5 // pred_check_branch
        %228 = sbr.rel (%p225) target = $region55
      $region54: #{fourier_avg_pool_3d.1} parent=5 // pred_region
        %s229 = ssub.s32 %s10, 1
        %s230 = sand.u32 %s105, 1
        %s231 = sand.u32 %s105, 1
        %s232 = smul.addr %s231, 64
        %s233 = scalar_lea.vmem [#allocation3], %s232
        // Predicated region
        $region56: #{fourier_avg_pool_3d.1} parent=54 // pred_check
          %p234 = pneg %p118
        $region57: #{fourier_avg_pool_3d.1} parent=54 // pred_check_branch
          %236 = sbr.rel (%p234) target = $region59
        $region58: #{fourier_avg_pool_3d.1} parent=54 // pred_region
          _
        $region59: #{fourier_avg_pool_3d.1} parent=54 // pred_fallthru
          _
        %p237 = pneg %p43
        %p238 = pneg %p40
        %s239 = smul.u32 128, %s20
        %p240 = scmp.lt.s32.totalorder %s239, 511
        %s241 = scalar_select %p240, %s239, 511
        %s242 = smul.addr %s241, 4
        %s243 = smul.addr %s242, 4
        %s244 = scalar_lea.vmem %s1, %s243
        %p245 = pneg %p69
        %p246 = pneg %p66
        %p247 = pneg %p90
        %p248 = pneg %p87
        %s249 = sand.u32 %s105, 1
        %s250 = sand.u32 %s105, 1
        %s251 = smul.addr %s250, 64
        %s252 = scalar_lea.vmem [#allocation3], %s251
        %p253 = pneg %p118
        %p254 = pneg %p115
        %p255 = pneg %p144
        %p256 = pneg %p141
        %s257 = smul.u32 2, %s19
        %p258 = scmp.lt.s32.totalorder %s257, 3
        %s259 = scalar_select %p258, %s257, 3
        %s260 = smul.addr %s259, 4
        %s261 = smul.addr %s260, 8
        %s262 = scalar_lea.vmem %s4, %s261
        %s263 = smul.u32 128, %s20
        %p264 = scmp.lt.s32.totalorder %s263, 511
        %s265 = scalar_select %p264, %s263, 511
        %s266 = smul.addr %s265, 4
        %s267 = smul.addr %s266, 4
        %s268 = scalar_lea.vmem %s1, %s267
        %s269 = smul.u32 128, %s20
        %s270 = smul.u32 2, %s19
        %s271 = smul.u32 8, %s20
        %s272 = smul.u32 2, %s19
        %p273 = scmp.lt.s32.totalorder %s272, 3
        %s274 = scalar_select %p273, %s272, 3
        %s275 = smul.addr %s274, 4
        %s276 = smul.addr %s275, 8
        %s277 = scalar_lea.vmem %s4, %s276
        %s278 = smul.u32 2, %s19
        %p280 = scmp.eq.s32.totalorder %s20, 0
        // Predicated region
        $region60: #{fourier_avg_pool_3d.1} parent=54 // pred_check
          %p281 = pneg %p280
        $region61: #{fourier_avg_pool_3d.1} parent=54 // pred_check_branch
          %283 = sbr.rel (%p281) target = $region63
        $region62: #{fourier_avg_pool_3d.1} parent=54 // pred_region
          %284 = vst [vmem:[#allocation2] sm:$0xff] 0.0
          %285 = vst [vmem:[#allocation2 + $0x8] sm:$0xff] 0.0
          %286 = vst [vmem:[#allocation2 + $0x10] sm:$0xff] 0.0
          %287 = vst [vmem:[#allocation2 + $0x18] sm:$0xff] 0.0
          %288 = vst [vmem:[#allocation2 + $0x20] sm:$0xff] 0.0
          %289 = vst [vmem:[#allocation2 + $0x28] sm:$0xff] 0.0
          %290 = vst [vmem:[#allocation2 + $0x30] sm:$0xff] 0.0
          %291 = vst [vmem:[#allocation2 + $0x38] sm:$0xff] 0.0
          %292 = vst [vmem:[#allocation2 + $0x40] sm:$0xff] 0.0
          %293 = vst [vmem:[#allocation2 + $0x48] sm:$0xff] 0.0
          %294 = vst [vmem:[#allocation2 + $0x50] sm:$0xff] 0.0
          %295 = vst [vmem:[#allocation2 + $0x58] sm:$0xff] 0.0
        $region63: #{fourier_avg_pool_3d.1} parent=54 // pred_fallthru
          _
        %v296 = vld [vmem:[%s0] sm:$0xf]
        %v297 = vld [vmem:[%s0 + $0x4] sm:$0xf]
        %v298 = vld [vmem:[%s0 + $0x8] sm:$0xf]
        %v299 = vld [vmem:[%s233] sm:$0xff]
        %v300 = vld [vmem:[%s233 + $0x8] sm:$0xff]
        %v301 = vld [vmem:[%s233 + $0x10] sm:$0xff]
        %v302 = vld [vmem:[%s233 + $0x18] sm:$0xff]
        %v303 = vld [vmem:[%s233 + $0x20] sm:$0xff]
        %v304 = vld [vmem:[%s233 + $0x28] sm:$0xff]
        %v305 = vld [vmem:[%s233 + $0x30] sm:$0xff]
        %v306 = vld [vmem:[%s233 + $0x38] sm:$0xff]
        %v310 = vunpack.c.l.b16 %v296
        %v311 = vunpack.c.l.b16 %v297
        %v312 = vunpack.c.l.b16 %v298
        %v313 = vpack.c.b16 %v311, %v310
        %v314 = vpack.c.b16 %v312, %v312
        %v323 = vunpack.c.l.b16 %v299
        %v324 = vunpack.c.h.b16 %v299
        %v325 = vunpack.c.l.b16 %v300
        %v326 = vunpack.c.h.b16 %v300
        %v327 = vunpack.c.l.b16 %v301
        %v328 = vunpack.c.h.b16 %v301
        %v329 = vunpack.c.l.b16 %v302
        %v330 = vunpack.c.h.b16 %v302
        %v331 = vunpack.c.l.b16 %v303
        %v332 = vunpack.c.h.b16 %v303
        %v333 = vunpack.c.l.b16 %v304
        %v334 = vunpack.c.h.b16 %v304
        %v335 = vunpack.c.l.b16 %v305
        %v336 = vunpack.c.h.b16 %v305
        %v337 = vunpack.c.l.b16 %v306
        %v338 = vunpack.c.h.b16 %v306
        %v339 = vpack.c.b16 %v331, %v323
        %v340 = vpack.c.b16 %v332, %v324
        %v341 = vpack.c.b16 %v333, %v325
        %v342 = vpack.c.b16 %v334, %v326
        %v343 = vpack.c.b16 %v335, %v327
        %v344 = vpack.c.b16 %v336, %v328
        %v345 = vpack.c.b16 %v337, %v329
        %v346 = vpack.c.b16 %v338, %v330
        %vm355 = vcmask 130048
        %v357 = vsel %vm355, %v313, 0
        %v360 = vsel %vm355, %v314, 0
        %362 = vmatpush.bf16.msra.mxu0 0
        %363 = vmatpush.bf16.msra.mxu0 0
        %364 = vmatpush.bf16.msra.mxu0 0
        %365 = vmatpush.bf16.msra.mxu0 0
        %366 = vmatpush.bf16.msra.mxu0 0
        %367 = vmatpush.bf16.msra.mxu0 0
        %368 = vmatpush.bf16.msra.mxu0 0
        %369 = vmatpush.bf16.msra.mxu0 %v339
        %370 = vmatmul.bf16.gmra.mxu0 %v357
        %v371 = vpop.f32.mrf.mxu0
        %v372 = vadd.f32 0.0, %v371
        %v373 = vpop.f32.mrf.mxu0
        %v374 = vadd.f32 0.0, %v373
        %375 = vmatmul.bf16.gmra.mxu0 %v360
        %v376 = vpop.f32.mrf.mxu0
        %v377 = vadd.f32 0.0, %v376
        %v378 = vpop.f32.mrf.mxu0
        %379 = vdwg.mxu0
        %380 = vmatpush.bf16.msra.mxu0 0
        %381 = vmatpush.bf16.msra.mxu0 0
        %382 = vmatpush.bf16.msra.mxu0 0
        %383 = vmatpush.bf16.msra.mxu0 0
        %384 = vmatpush.bf16.msra.mxu0 0
        %385 = vmatpush.bf16.msra.mxu0 0
        %386 = vmatpush.bf16.msra.mxu0 0
        %387 = vmatpush.bf16.msra.mxu0 %v340
        %388 = vmatmul.bf16.gmra.mxu0 %v357
        %v389 = vpop.f32.mrf.mxu0
        %v390 = vadd.f32 0.0, %v389
        %v391 = vpop.f32.mrf.mxu0
        %v392 = vadd.f32 0.0, %v391
        %393 = vmatmul.bf16.gmra.mxu0 %v360
        %v394 = vpop.f32.mrf.mxu0
        %v395 = vadd.f32 0.0, %v394
        %v396 = vpop.f32.mrf.mxu0
        %397 = vdwg.mxu0
        %398 = vmatpush.bf16.msra.mxu0 0
        %399 = vmatpush.bf16.msra.mxu0 0
        %400 = vmatpush.bf16.msra.mxu0 0
        %401 = vmatpush.bf16.msra.mxu0 0
        %402 = vmatpush.bf16.msra.mxu0 0
        %403 = vmatpush.bf16.msra.mxu0 0
        %404 = vmatpush.bf16.msra.mxu0 0
        %405 = vmatpush.bf16.msra.mxu0 %v341
        %406 = vmatmul.bf16.gmra.mxu0 %v357
        %v407 = vpop.f32.mrf.mxu0
        %v408 = vadd.f32 0.0, %v407
        %v409 = vpop.f32.mrf.mxu0
        %v410 = vadd.f32 0.0, %v409
        %411 = vmatmul.bf16.gmra.mxu0 %v360
        %v412 = vpop.f32.mrf.mxu0
        %v413 = vadd.f32 0.0, %v412
        %v414 = vpop.f32.mrf.mxu0
        %415 = vdwg.mxu0
        %416 = vmatpush.bf16.msra.mxu0 0
        %417 = vmatpush.bf16.msra.mxu0 0
        %418 = vmatpush.bf16.msra.mxu0 0
        %419 = vmatpush.bf16.msra.mxu0 0
        %420 = vmatpush.bf16.msra.mxu0 0
        %421 = vmatpush.bf16.msra.mxu0 0
        %422 = vmatpush.bf16.msra.mxu0 0
        %423 = vmatpush.bf16.msra.mxu0 %v342
        %424 = vmatmul.bf16.gmra.mxu0 %v357
        %v425 = vpop.f32.mrf.mxu0
        %v426 = vadd.f32 0.0, %v425
        %v427 = vpop.f32.mrf.mxu0
        %v428 = vadd.f32 0.0, %v427
        %429 = vmatmul.bf16.gmra.mxu0 %v360
        %v430 = vpop.f32.mrf.mxu0
        %v431 = vadd.f32 0.0, %v430
        %v432 = vpop.f32.mrf.mxu0
        %433 = vdwg.mxu0
        %434 = vmatpush.bf16.msra.mxu0 0
        %435 = vmatpush.bf16.msra.mxu0 0
        %436 = vmatpush.bf16.msra.mxu0 0
        %437 = vmatpush.bf16.msra.mxu0 0
        %438 = vmatpush.bf16.msra.mxu0 0
        %439 = vmatpush.bf16.msra.mxu0 0
        %440 = vmatpush.bf16.msra.mxu0 0
        %441 = vmatpush.bf16.msra.mxu0 %v343
        %442 = vmatmul.bf16.gmra.mxu0 %v357
        %v443 = vpop.f32.mrf.mxu0
        %v444 = vadd.f32 0.0, %v443
        %v445 = vpop.f32.mrf.mxu0
        %v446 = vadd.f32 0.0, %v445
        %447 = vmatmul.bf16.gmra.mxu0 %v360
        %v448 = vpop.f32.mrf.mxu0
        %v449 = vadd.f32 0.0, %v448
        %v450 = vpop.f32.mrf.mxu0
        %451 = vdwg.mxu0
        %452 = vmatpush.bf16.msra.mxu0 0
        %453 = vmatpush.bf16.msra.mxu0 0
        %454 = vmatpush.bf16.msra.mxu0 0
        %455 = vmatpush.bf16.msra.mxu0 0
        %456 = vmatpush.bf16.msra.mxu0 0
        %457 = vmatpush.bf16.msra.mxu0 0
        %458 = vmatpush.bf16.msra.mxu0 0
        %459 = vmatpush.bf16.msra.mxu0 %v344
        %460 = vmatmul.bf16.gmra.mxu0 %v357
        %v461 = vpop.f32.mrf.mxu0
        %v462 = vadd.f32 0.0, %v461
        %v463 = vpop.f32.mrf.mxu0
        %v464 = vadd.f32 0.0, %v463
        %465 = vmatmul.bf16.gmra.mxu0 %v360
        %v466 = vpop.f32.mrf.mxu0
        %v467 = vadd.f32 0.0, %v466
        %v468 = vpop.f32.mrf.mxu0
        %469 = vdwg.mxu0
        %470 = vmatpush.bf16.msra.mxu0 0
        %471 = vmatpush.bf16.msra.mxu0 0
        %472 = vmatpush.bf16.msra.mxu0 0
        %473 = vmatpush.bf16.msra.mxu0 0
        %474 = vmatpush.bf16.msra.mxu0 0
        %475 = vmatpush.bf16.msra.mxu0 0
        %476 = vmatpush.bf16.msra.mxu0 0
        %477 = vmatpush.bf16.msra.mxu0 %v345
        %478 = vmatmul.bf16.gmra.mxu0 %v357
        %v479 = vpop.f32.mrf.mxu0
        %v480 = vadd.f32 0.0, %v479
        %v481 = vpop.f32.mrf.mxu0
        %v482 = vadd.f32 0.0, %v481
        %483 = vmatmul.bf16.gmra.mxu0 %v360
        %v484 = vpop.f32.mrf.mxu0
        %v485 = vadd.f32 0.0, %v484
        %v486 = vpop.f32.mrf.mxu0
        %487 = vdwg.mxu0
        %488 = vmatpush.bf16.msra.mxu0 0
        %489 = vmatpush.bf16.msra.mxu0 0
        %490 = vmatpush.bf16.msra.mxu0 0
        %491 = vmatpush.bf16.msra.mxu0 0
        %492 = vmatpush.bf16.msra.mxu0 0
        %493 = vmatpush.bf16.msra.mxu0 0
        %494 = vmatpush.bf16.msra.mxu0 0
        %495 = vmatpush.bf16.msra.mxu0 %v346
        %496 = vmatmul.bf16.gmra.mxu0 %v357
        %v497 = vpop.f32.mrf.mxu0
        %v498 = vadd.f32 0.0, %v497
        %v499 = vpop.f32.mrf.mxu0
        %v500 = vadd.f32 0.0, %v499
        %501 = vmatmul.bf16.gmra.mxu0 %v360
        %v502 = vpop.f32.mrf.mxu0
        %v503 = vadd.f32 0.0, %v502
        %v504 = vpop.f32.mrf.mxu0
        %505 = vdwg.mxu0
        %v506 = vld [vmem:[#allocation2] sm:$0xff]
        %v507 = vld [vmem:[#allocation2 + $0x8] sm:$0xff]
        %v508 = vld [vmem:[#allocation2 + $0x10] sm:$0xff]
        %v509 = vld [vmem:[#allocation2 + $0x18] sm:$0xff]
        %v510 = vld [vmem:[#allocation2 + $0x20] sm:$0xff]
        %v511 = vld [vmem:[#allocation2 + $0x28] sm:$0xff]
        %v512 = vld [vmem:[#allocation2 + $0x30] sm:$0xff]
        %v513 = vld [vmem:[#allocation2 + $0x38] sm:$0xff]
        %v514 = vld [vmem:[#allocation2 + $0x40] sm:$0xff]
        %v515 = vld [vmem:[#allocation2 + $0x48] sm:$0xff]
        %v516 = vld [vmem:[#allocation2 + $0x50] sm:$0xff]
        %v517 = vld [vmem:[#allocation2 + $0x58] sm:$0xff]
        %v518 = vpack.c.bf16 %v374, %v372
        %v519 = vpack.c.bf16 %v392, %v390
        %v520 = vpack.c.bf16 %v410, %v408
        %v521 = vpack.c.bf16 %v428, %v426
        %v522 = vpack.c.bf16 %v446, %v444
        %v523 = vpack.c.bf16 %v464, %v462
        %v524 = vpack.c.bf16 %v482, %v480
        %v525 = vpack.c.bf16 %v500, %v498
        %v526 = vpack.c.bf16 %v377, %v377
        %v527 = vpack.c.bf16 %v395, %v395
        %v528 = vpack.c.bf16 %v413, %v413
        %v529 = vpack.c.bf16 %v431, %v431
        %v530 = vpack.c.bf16 %v449, %v449
        %v531 = vpack.c.bf16 %v467, %v467
        %v532 = vpack.c.bf16 %v485, %v485
        %v533 = vpack.c.bf16 %v503, %v503
        %v534 = vld [vmem:[%s268] sm:$0xff]
        %v535 = vld [vmem:[%s268 + $0x8] sm:$0xff]
        %v536 = vld [vmem:[%s268 + $0x10] sm:$0xff]
        %v537 = vld [vmem:[%s268 + $0x18] sm:$0xff]
        %v538 = vld [vmem:[%s268 + $0x20] sm:$0xff]
        %v539 = vld [vmem:[%s268 + $0x28] sm:$0xff]
        %v540 = vld [vmem:[%s268 + $0x30] sm:$0xff]
        %v541 = vld [vmem:[%s268 + $0x38] sm:$0xff]
        %v542 = vld [vmem:[%s268 + $0x40] sm:$0xff]
        %v543 = vld [vmem:[%s268 + $0x48] sm:$0xff]
        %v544 = vld [vmem:[%s268 + $0x50] sm:$0xff]
        %v545 = vld [vmem:[%s268 + $0x58] sm:$0xff]
        %v546 = vld [vmem:[%s268 + $0x60] sm:$0xff]
        %v547 = vld [vmem:[%s268 + $0x68] sm:$0xff]
        %v548 = vld [vmem:[%s268 + $0x70] sm:$0xff]
        %v549 = vld [vmem:[%s268 + $0x78] sm:$0xff]
        %v550 = vld [vmem:[%s268 + $0x80] sm:$0xff]
        %v551 = vld [vmem:[%s268 + $0x88] sm:$0xff]
        %v552 = vld [vmem:[%s268 + $0x90] sm:$0xff]
        %v553 = vld [vmem:[%s268 + $0x98] sm:$0xff]
        %v554 = vld [vmem:[%s268 + $0xa0] sm:$0xff]
        %v555 = vld [vmem:[%s268 + $0xa8] sm:$0xff]
        %v556 = vld [vmem:[%s268 + $0xb0] sm:$0xff]
        %v557 = vld [vmem:[%s268 + $0xb8] sm:$0xff]
        %v558 = vld [vmem:[%s268 + $0xc0] sm:$0xff]
        %v559 = vld [vmem:[%s268 + $0xc8] sm:$0xff]
        %v560 = vld [vmem:[%s268 + $0xd0] sm:$0xff]
        %v561 = vld [vmem:[%s268 + $0xd8] sm:$0xff]
        %v562 = vld [vmem:[%s268 + $0xe0] sm:$0xff]
        %v563 = vld [vmem:[%s268 + $0xe8] sm:$0xff]
        %v564 = vld [vmem:[%s268 + $0xf0] sm:$0xff]
        %v565 = vld [vmem:[%s268 + $0xf8] sm:$0xff]
        %v566 = vld [vmem:[%s268 + $0x100] sm:$0xff]
        %v567 = vld [vmem:[%s268 + $0x108] sm:$0xff]
        %v568 = vld [vmem:[%s268 + $0x110] sm:$0xff]
        %v569 = vld [vmem:[%s268 + $0x118] sm:$0xff]
        %v570 = vld [vmem:[%s268 + $0x120] sm:$0xff]
        %v571 = vld [vmem:[%s268 + $0x128] sm:$0xff]
        %v572 = vld [vmem:[%s268 + $0x130] sm:$0xff]
        %v573 = vld [vmem:[%s268 + $0x138] sm:$0xff]
        %v574 = vld [vmem:[%s268 + $0x140] sm:$0xff]
        %v575 = vld [vmem:[%s268 + $0x148] sm:$0xff]
        %v576 = vld [vmem:[%s268 + $0x150] sm:$0xff]
        %v577 = vld [vmem:[%s268 + $0x158] sm:$0xff]
        %v578 = vld [vmem:[%s268 + $0x160] sm:$0xff]
        %v579 = vld [vmem:[%s268 + $0x168] sm:$0xff]
        %v580 = vld [vmem:[%s268 + $0x170] sm:$0xff]
        %v581 = vld [vmem:[%s268 + $0x178] sm:$0xff]
        %v582 = vld [vmem:[%s268 + $0x180] sm:$0xff]
        %v583 = vld [vmem:[%s268 + $0x188] sm:$0xff]
        %v584 = vld [vmem:[%s268 + $0x190] sm:$0xff]
        %v585 = vld [vmem:[%s268 + $0x198] sm:$0xff]
        %v586 = vld [vmem:[%s268 + $0x1a0] sm:$0xff]
        %v587 = vld [vmem:[%s268 + $0x1a8] sm:$0xff]
        %v588 = vld [vmem:[%s268 + $0x1b0] sm:$0xff]
        %v589 = vld [vmem:[%s268 + $0x1b8] sm:$0xff]
        %v590 = vld [vmem:[%s268 + $0x1c0] sm:$0xff]
        %v591 = vld [vmem:[%s268 + $0x1c8] sm:$0xff]
        %v592 = vld [vmem:[%s268 + $0x1d0] sm:$0xff]
        %v593 = vld [vmem:[%s268 + $0x1d8] sm:$0xff]
        %v594 = vld [vmem:[%s268 + $0x1e0] sm:$0xff]
        %v595 = vld [vmem:[%s268 + $0x1e8] sm:$0xff]
        %v596 = vld [vmem:[%s268 + $0x1f0] sm:$0xff]
        %v597 = vld [vmem:[%s268 + $0x1f8] sm:$0xff]
        %v598 = vld [vmem:[%s268 + $0x200] sm:$0xff]
        %v599 = vld [vmem:[%s268 + $0x208] sm:$0xff]
        %v600 = vld [vmem:[%s268 + $0x210] sm:$0xff]
        %v601 = vld [vmem:[%s268 + $0x218] sm:$0xff]
        %v602 = vld [vmem:[%s268 + $0x220] sm:$0xff]
        %v603 = vld [vmem:[%s268 + $0x228] sm:$0xff]
        %v604 = vld [vmem:[%s268 + $0x230] sm:$0xff]
        %v605 = vld [vmem:[%s268 + $0x238] sm:$0xff]
        %v606 = vld [vmem:[%s268 + $0x240] sm:$0xff]
        %v607 = vld [vmem:[%s268 + $0x248] sm:$0xff]
        %v608 = vld [vmem:[%s268 + $0x250] sm:$0xff]
        %v609 = vld [vmem:[%s268 + $0x258] sm:$0xff]
        %v610 = vld [vmem:[%s268 + $0x260] sm:$0xff]
        %v611 = vld [vmem:[%s268 + $0x268] sm:$0xff]
        %v612 = vld [vmem:[%s268 + $0x270] sm:$0xff]
        %v613 = vld [vmem:[%s268 + $0x278] sm:$0xff]
        %v614 = vld [vmem:[%s268 + $0x280] sm:$0xff]
        %v615 = vld [vmem:[%s268 + $0x288] sm:$0xff]
        %v616 = vld [vmem:[%s268 + $0x290] sm:$0xff]
        %v617 = vld [vmem:[%s268 + $0x298] sm:$0xff]
        %v618 = vld [vmem:[%s268 + $0x2a0] sm:$0xff]
        %v619 = vld [vmem:[%s268 + $0x2a8] sm:$0xff]
        %v620 = vld [vmem:[%s268 + $0x2b0] sm:$0xff]
        %v621 = vld [vmem:[%s268 + $0x2b8] sm:$0xff]
        %v622 = vld [vmem:[%s268 + $0x2c0] sm:$0xff]
        %v623 = vld [vmem:[%s268 + $0x2c8] sm:$0xff]
        %v624 = vld [vmem:[%s268 + $0x2d0] sm:$0xff]
        %v625 = vld [vmem:[%s268 + $0x2d8] sm:$0xff]
        %v626 = vld [vmem:[%s268 + $0x2e0] sm:$0xff]
        %v627 = vld [vmem:[%s268 + $0x2e8] sm:$0xff]
        %v628 = vld [vmem:[%s268 + $0x2f0] sm:$0xff]
        %v629 = vld [vmem:[%s268 + $0x2f8] sm:$0xff]
        %v630 = vld [vmem:[%s268 + $0x300] sm:$0xff]
        %v631 = vld [vmem:[%s268 + $0x308] sm:$0xff]
        %v632 = vld [vmem:[%s268 + $0x310] sm:$0xff]
        %v633 = vld [vmem:[%s268 + $0x318] sm:$0xff]
        %v634 = vld [vmem:[%s268 + $0x320] sm:$0xff]
        %v635 = vld [vmem:[%s268 + $0x328] sm:$0xff]
        %v636 = vld [vmem:[%s268 + $0x330] sm:$0xff]
        %v637 = vld [vmem:[%s268 + $0x338] sm:$0xff]
        %v638 = vld [vmem:[%s268 + $0x340] sm:$0xff]
        %v639 = vld [vmem:[%s268 + $0x348] sm:$0xff]
        %v640 = vld [vmem:[%s268 + $0x350] sm:$0xff]
        %v641 = vld [vmem:[%s268 + $0x358] sm:$0xff]
        %v642 = vld [vmem:[%s268 + $0x360] sm:$0xff]
        %v643 = vld [vmem:[%s268 + $0x368] sm:$0xff]
        %v644 = vld [vmem:[%s268 + $0x370] sm:$0xff]
        %v645 = vld [vmem:[%s268 + $0x378] sm:$0xff]
        %v646 = vld [vmem:[%s268 + $0x380] sm:$0xff]
        %v647 = vld [vmem:[%s268 + $0x388] sm:$0xff]
        %v648 = vld [vmem:[%s268 + $0x390] sm:$0xff]
        %v649 = vld [vmem:[%s268 + $0x398] sm:$0xff]
        %v650 = vld [vmem:[%s268 + $0x3a0] sm:$0xff]
        %v651 = vld [vmem:[%s268 + $0x3a8] sm:$0xff]
        %v652 = vld [vmem:[%s268 + $0x3b0] sm:$0xff]
        %v653 = vld [vmem:[%s268 + $0x3b8] sm:$0xff]
        %v654 = vld [vmem:[%s268 + $0x3c0] sm:$0xff]
        %v655 = vld [vmem:[%s268 + $0x3c8] sm:$0xff]
        %v656 = vld [vmem:[%s268 + $0x3d0] sm:$0xff]
        %v657 = vld [vmem:[%s268 + $0x3d8] sm:$0xff]
        %v658 = vld [vmem:[%s268 + $0x3e0] sm:$0xff]
        %v659 = vld [vmem:[%s268 + $0x3e8] sm:$0xff]
        %v660 = vld [vmem:[%s268 + $0x3f0] sm:$0xff]
        %v661 = vld [vmem:[%s268 + $0x3f8] sm:$0xff]
        %v662 = vld [vmem:[%s268 + $0x400] sm:$0xff]
        %v663 = vld [vmem:[%s268 + $0x408] sm:$0xff]
        %v664 = vld [vmem:[%s268 + $0x410] sm:$0xff]
        %v665 = vld [vmem:[%s268 + $0x418] sm:$0xff]
        %v666 = vld [vmem:[%s268 + $0x420] sm:$0xff]
        %v667 = vld [vmem:[%s268 + $0x428] sm:$0xff]
        %v668 = vld [vmem:[%s268 + $0x430] sm:$0xff]
        %v669 = vld [vmem:[%s268 + $0x438] sm:$0xff]
        %v670 = vld [vmem:[%s268 + $0x440] sm:$0xff]
        %v671 = vld [vmem:[%s268 + $0x448] sm:$0xff]
        %v672 = vld [vmem:[%s268 + $0x450] sm:$0xff]
        %v673 = vld [vmem:[%s268 + $0x458] sm:$0xff]
        %v674 = vld [vmem:[%s268 + $0x460] sm:$0xff]
        %v675 = vld [vmem:[%s268 + $0x468] sm:$0xff]
        %v676 = vld [vmem:[%s268 + $0x470] sm:$0xff]
        %v677 = vld [vmem:[%s268 + $0x478] sm:$0xff]
        %v678 = vld [vmem:[%s268 + $0x480] sm:$0xff]
        %v679 = vld [vmem:[%s268 + $0x488] sm:$0xff]
        %v680 = vld [vmem:[%s268 + $0x490] sm:$0xff]
        %v681 = vld [vmem:[%s268 + $0x498] sm:$0xff]
        %v682 = vld [vmem:[%s268 + $0x4a0] sm:$0xff]
        %v683 = vld [vmem:[%s268 + $0x4a8] sm:$0xff]
        %v684 = vld [vmem:[%s268 + $0x4b0] sm:$0xff]
        %v685 = vld [vmem:[%s268 + $0x4b8] sm:$0xff]
        %v686 = vld [vmem:[%s268 + $0x4c0] sm:$0xff]
        %v687 = vld [vmem:[%s268 + $0x4c8] sm:$0xff]
        %v688 = vld [vmem:[%s268 + $0x4d0] sm:$0xff]
        %v689 = vld [vmem:[%s268 + $0x4d8] sm:$0xff]
        %v690 = vld [vmem:[%s268 + $0x4e0] sm:$0xff]
        %v691 = vld [vmem:[%s268 + $0x4e8] sm:$0xff]
        %v692 = vld [vmem:[%s268 + $0x4f0] sm:$0xff]
        %v693 = vld [vmem:[%s268 + $0x4f8] sm:$0xff]
        %v694 = vld [vmem:[%s268 + $0x500] sm:$0xff]
        %v695 = vld [vmem:[%s268 + $0x508] sm:$0xff]
        %v696 = vld [vmem:[%s268 + $0x510] sm:$0xff]
        %v697 = vld [vmem:[%s268 + $0x518] sm:$0xff]
        %v698 = vld [vmem:[%s268 + $0x520] sm:$0xff]
        %v699 = vld [vmem:[%s268 + $0x528] sm:$0xff]
        %v700 = vld [vmem:[%s268 + $0x530] sm:$0xff]
        %v701 = vld [vmem:[%s268 + $0x538] sm:$0xff]
        %v702 = vld [vmem:[%s268 + $0x540] sm:$0xff]
        %v703 = vld [vmem:[%s268 + $0x548] sm:$0xff]
        %v704 = vld [vmem:[%s268 + $0x550] sm:$0xff]
        %v705 = vld [vmem:[%s268 + $0x558] sm:$0xff]
        %v706 = vld [vmem:[%s268 + $0x560] sm:$0xff]
        %v707 = vld [vmem:[%s268 + $0x568] sm:$0xff]
        %v708 = vld [vmem:[%s268 + $0x570] sm:$0xff]
        %v709 = vld [vmem:[%s268 + $0x578] sm:$0xff]
        %v710 = vld [vmem:[%s268 + $0x580] sm:$0xff]
        %v711 = vld [vmem:[%s268 + $0x588] sm:$0xff]
        %v712 = vld [vmem:[%s268 + $0x590] sm:$0xff]
        %v713 = vld [vmem:[%s268 + $0x598] sm:$0xff]
        %v714 = vld [vmem:[%s268 + $0x5a0] sm:$0xff]
        %v715 = vld [vmem:[%s268 + $0x5a8] sm:$0xff]
        %v716 = vld [vmem:[%s268 + $0x5b0] sm:$0xff]
        %v717 = vld [vmem:[%s268 + $0x5b8] sm:$0xff]
        %v718 = vld [vmem:[%s268 + $0x5c0] sm:$0xff]
        %v719 = vld [vmem:[%s268 + $0x5c8] sm:$0xff]
        %v720 = vld [vmem:[%s268 + $0x5d0] sm:$0xff]
        %v721 = vld [vmem:[%s268 + $0x5d8] sm:$0xff]
        %v722 = vld [vmem:[%s268 + $0x5e0] sm:$0xff]
        %v723 = vld [vmem:[%s268 + $0x5e8] sm:$0xff]
        %v724 = vld [vmem:[%s268 + $0x5f0] sm:$0xff]
        %v725 = vld [vmem:[%s268 + $0x5f8] sm:$0xff]
        %v726 = vld [vmem:[%s268 + $0x600] sm:$0xff]
        %v727 = vld [vmem:[%s268 + $0x608] sm:$0xff]
        %v728 = vld [vmem:[%s268 + $0x610] sm:$0xff]
        %v729 = vld [vmem:[%s268 + $0x618] sm:$0xff]
        %v730 = vld [vmem:[%s268 + $0x620] sm:$0xff]
        %v731 = vld [vmem:[%s268 + $0x628] sm:$0xff]
        %v732 = vld [vmem:[%s268 + $0x630] sm:$0xff]
        %v733 = vld [vmem:[%s268 + $0x638] sm:$0xff]
        %v734 = vld [vmem:[%s268 + $0x640] sm:$0xff]
        %v735 = vld [vmem:[%s268 + $0x648] sm:$0xff]
        %v736 = vld [vmem:[%s268 + $0x650] sm:$0xff]
        %v737 = vld [vmem:[%s268 + $0x658] sm:$0xff]
        %v738 = vld [vmem:[%s268 + $0x660] sm:$0xff]
        %v739 = vld [vmem:[%s268 + $0x668] sm:$0xff]
        %v740 = vld [vmem:[%s268 + $0x670] sm:$0xff]
        %v741 = vld [vmem:[%s268 + $0x678] sm:$0xff]
        %v742 = vld [vmem:[%s268 + $0x680] sm:$0xff]
        %v743 = vld [vmem:[%s268 + $0x688] sm:$0xff]
        %v744 = vld [vmem:[%s268 + $0x690] sm:$0xff]
        %v745 = vld [vmem:[%s268 + $0x698] sm:$0xff]
        %v746 = vld [vmem:[%s268 + $0x6a0] sm:$0xff]
        %v747 = vld [vmem:[%s268 + $0x6a8] sm:$0xff]
        %v748 = vld [vmem:[%s268 + $0x6b0] sm:$0xff]
        %v749 = vld [vmem:[%s268 + $0x6b8] sm:$0xff]
        %v750 = vld [vmem:[%s268 + $0x6c0] sm:$0xff]
        %v751 = vld [vmem:[%s268 + $0x6c8] sm:$0xff]
        %v752 = vld [vmem:[%s268 + $0x6d0] sm:$0xff]
        %v753 = vld [vmem:[%s268 + $0x6d8] sm:$0xff]
        %v754 = vld [vmem:[%s268 + $0x6e0] sm:$0xff]
        %v755 = vld [vmem:[%s268 + $0x6e8] sm:$0xff]
        %v756 = vld [vmem:[%s268 + $0x6f0] sm:$0xff]
        %v757 = vld [vmem:[%s268 + $0x6f8] sm:$0xff]
        %v758 = vld [vmem:[%s268 + $0x700] sm:$0xff]
        %v759 = vld [vmem:[%s268 + $0x708] sm:$0xff]
        %v760 = vld [vmem:[%s268 + $0x710] sm:$0xff]
        %v761 = vld [vmem:[%s268 + $0x718] sm:$0xff]
        %v762 = vld [vmem:[%s268 + $0x720] sm:$0xff]
        %v763 = vld [vmem:[%s268 + $0x728] sm:$0xff]
        %v764 = vld [vmem:[%s268 + $0x730] sm:$0xff]
        %v765 = vld [vmem:[%s268 + $0x738] sm:$0xff]
        %v766 = vld [vmem:[%s268 + $0x740] sm:$0xff]
        %v767 = vld [vmem:[%s268 + $0x748] sm:$0xff]
        %v768 = vld [vmem:[%s268 + $0x750] sm:$0xff]
        %v769 = vld [vmem:[%s268 + $0x758] sm:$0xff]
        %v770 = vld [vmem:[%s268 + $0x760] sm:$0xff]
        %v771 = vld [vmem:[%s268 + $0x768] sm:$0xff]
        %v772 = vld [vmem:[%s268 + $0x770] sm:$0xff]
        %v773 = vld [vmem:[%s268 + $0x778] sm:$0xff]
        %v774 = vld [vmem:[%s268 + $0x780] sm:$0xff]
        %v775 = vld [vmem:[%s268 + $0x788] sm:$0xff]
        %v776 = vld [vmem:[%s268 + $0x790] sm:$0xff]
        %v777 = vld [vmem:[%s268 + $0x798] sm:$0xff]
        %v778 = vld [vmem:[%s268 + $0x7a0] sm:$0xff]
        %v779 = vld [vmem:[%s268 + $0x7a8] sm:$0xff]
        %v780 = vld [vmem:[%s268 + $0x7b0] sm:$0xff]
        %v781 = vld [vmem:[%s268 + $0x7b8] sm:$0xff]
        %v782 = vld [vmem:[%s268 + $0x7c0] sm:$0xff]
        %v783 = vld [vmem:[%s268 + $0x7c8] sm:$0xff]
        %v784 = vld [vmem:[%s268 + $0x7d0] sm:$0xff]
        %v785 = vld [vmem:[%s268 + $0x7d8] sm:$0xff]
        %v786 = vld [vmem:[%s268 + $0x7e0] sm:$0xff]
        %v787 = vld [vmem:[%s268 + $0x7e8] sm:$0xff]
        %v788 = vld [vmem:[%s268 + $0x7f0] sm:$0xff]
        %v789 = vld [vmem:[%s268 + $0x7f8] sm:$0xff]
        %v1046 = vunpack.c.l.b16 %v534
        %v1047 = vunpack.c.h.b16 %v534
        %v1048 = vunpack.c.l.b16 %v535
        %v1049 = vunpack.c.h.b16 %v535
        %v1050 = vunpack.c.l.b16 %v536
        %v1051 = vunpack.c.h.b16 %v536
        %v1052 = vunpack.c.l.b16 %v537
        %v1053 = vunpack.c.h.b16 %v537
        %v1054 = vunpack.c.l.b16 %v538
        %v1055 = vunpack.c.h.b16 %v538
        %v1056 = vunpack.c.l.b16 %v539
        %v1057 = vunpack.c.h.b16 %v539
        %v1058 = vunpack.c.l.b16 %v540
        %v1059 = vunpack.c.h.b16 %v540
        %v1060 = vunpack.c.l.b16 %v541
        %v1061 = vunpack.c.h.b16 %v541
        %v1062 = vunpack.c.l.b16 %v542
        %v1063 = vunpack.c.h.b16 %v542
        %v1064 = vunpack.c.l.b16 %v543
        %v1065 = vunpack.c.h.b16 %v543
        %v1066 = vunpack.c.l.b16 %v544
        %v1067 = vunpack.c.h.b16 %v544
        %v1068 = vunpack.c.l.b16 %v545
        %v1069 = vunpack.c.h.b16 %v545
        %v1070 = vunpack.c.l.b16 %v546
        %v1071 = vunpack.c.h.b16 %v546
        %v1072 = vunpack.c.l.b16 %v547
        %v1073 = vunpack.c.h.b16 %v547
        %v1074 = vunpack.c.l.b16 %v548
        %v1075 = vunpack.c.h.b16 %v548
        %v1076 = vunpack.c.l.b16 %v549
        %v1077 = vunpack.c.h.b16 %v549
        %v1078 = vunpack.c.l.b16 %v550
        %v1079 = vunpack.c.h.b16 %v550
        %v1080 = vunpack.c.l.b16 %v551
        %v1081 = vunpack.c.h.b16 %v551
        %v1082 = vunpack.c.l.b16 %v552
        %v1083 = vunpack.c.h.b16 %v552
        %v1084 = vunpack.c.l.b16 %v553
        %v1085 = vunpack.c.h.b16 %v553
        %v1086 = vunpack.c.l.b16 %v554
        %v1087 = vunpack.c.h.b16 %v554
        %v1088 = vunpack.c.l.b16 %v555
        %v1089 = vunpack.c.h.b16 %v555
        %v1090 = vunpack.c.l.b16 %v556
        %v1091 = vunpack.c.h.b16 %v556
        %v1092 = vunpack.c.l.b16 %v557
        %v1093 = vunpack.c.h.b16 %v557
        %v1094 = vunpack.c.l.b16 %v558
        %v1095 = vunpack.c.h.b16 %v558
        %v1096 = vunpack.c.l.b16 %v559
        %v1097 = vunpack.c.h.b16 %v559
        %v1098 = vunpack.c.l.b16 %v560
        %v1099 = vunpack.c.h.b16 %v560
        %v1100 = vunpack.c.l.b16 %v561
        %v1101 = vunpack.c.h.b16 %v561
        %v1102 = vunpack.c.l.b16 %v562
        %v1103 = vunpack.c.h.b16 %v562
        %v1104 = vunpack.c.l.b16 %v563
        %v1105 = vunpack.c.h.b16 %v563
        %v1106 = vunpack.c.l.b16 %v564
        %v1107 = vunpack.c.h.b16 %v564
        %v1108 = vunpack.c.l.b16 %v565
        %v1109 = vunpack.c.h.b16 %v565
        %v1110 = vunpack.c.l.b16 %v566
        %v1111 = vunpack.c.h.b16 %v566
        %v1112 = vunpack.c.l.b16 %v567
        %v1113 = vunpack.c.h.b16 %v567
        %v1114 = vunpack.c.l.b16 %v568
        %v1115 = vunpack.c.h.b16 %v568
        %v1116 = vunpack.c.l.b16 %v569
        %v1117 = vunpack.c.h.b16 %v569
        %v1118 = vunpack.c.l.b16 %v570
        %v1119 = vunpack.c.h.b16 %v570
        %v1120 = vunpack.c.l.b16 %v571
        %v1121 = vunpack.c.h.b16 %v571
        %v1122 = vunpack.c.l.b16 %v572
        %v1123 = vunpack.c.h.b16 %v572
        %v1124 = vunpack.c.l.b16 %v573
        %v1125 = vunpack.c.h.b16 %v573
        %v1126 = vunpack.c.l.b16 %v574
        %v1127 = vunpack.c.h.b16 %v574
        %v1128 = vunpack.c.l.b16 %v575
        %v1129 = vunpack.c.h.b16 %v575
        %v1130 = vunpack.c.l.b16 %v576
        %v1131 = vunpack.c.h.b16 %v576
        %v1132 = vunpack.c.l.b16 %v577
        %v1133 = vunpack.c.h.b16 %v577
        %v1134 = vunpack.c.l.b16 %v578
        %v1135 = vunpack.c.h.b16 %v578
        %v1136 = vunpack.c.l.b16 %v579
        %v1137 = vunpack.c.h.b16 %v579
        %v1138 = vunpack.c.l.b16 %v580
        %v1139 = vunpack.c.h.b16 %v580
        %v1140 = vunpack.c.l.b16 %v581
        %v1141 = vunpack.c.h.b16 %v581
        %v1142 = vunpack.c.l.b16 %v582
        %v1143 = vunpack.c.h.b16 %v582
        %v1144 = vunpack.c.l.b16 %v583
        %v1145 = vunpack.c.h.b16 %v583
        %v1146 = vunpack.c.l.b16 %v584
        %v1147 = vunpack.c.h.b16 %v584
        %v1148 = vunpack.c.l.b16 %v585
        %v1149 = vunpack.c.h.b16 %v585
        %v1150 = vunpack.c.l.b16 %v586
        %v1151 = vunpack.c.h.b16 %v586
        %v1152 = vunpack.c.l.b16 %v587
        %v1153 = vunpack.c.h.b16 %v587
        %v1154 = vunpack.c.l.b16 %v588
        %v1155 = vunpack.c.h.b16 %v588
        %v1156 = vunpack.c.l.b16 %v589
        %v1157 = vunpack.c.h.b16 %v589
        %v1158 = vunpack.c.l.b16 %v590
        %v1159 = vunpack.c.h.b16 %v590
        %v1160 = vunpack.c.l.b16 %v591
        %v1161 = vunpack.c.h.b16 %v591
        %v1162 = vunpack.c.l.b16 %v592
        %v1163 = vunpack.c.h.b16 %v592
        %v1164 = vunpack.c.l.b16 %v593
        %v1165 = vunpack.c.h.b16 %v593
        %v1166 = vunpack.c.l.b16 %v594
        %v1167 = vunpack.c.h.b16 %v594
        %v1168 = vunpack.c.l.b16 %v595
        %v1169 = vunpack.c.h.b16 %v595
        %v1170 = vunpack.c.l.b16 %v596
        %v1171 = vunpack.c.h.b16 %v596
        %v1172 = vunpack.c.l.b16 %v597
        %v1173 = vunpack.c.h.b16 %v597
        %v1174 = vunpack.c.l.b16 %v598
        %v1175 = vunpack.c.h.b16 %v598
        %v1176 = vunpack.c.l.b16 %v599
        %v1177 = vunpack.c.h.b16 %v599
        %v1178 = vunpack.c.l.b16 %v600
        %v1179 = vunpack.c.h.b16 %v600
        %v1180 = vunpack.c.l.b16 %v601
        %v1181 = vunpack.c.h.b16 %v601
        %v1182 = vunpack.c.l.b16 %v602
        %v1183 = vunpack.c.h.b16 %v602
        %v1184 = vunpack.c.l.b16 %v603
        %v1185 = vunpack.c.h.b16 %v603
        %v1186 = vunpack.c.l.b16 %v604
        %v1187 = vunpack.c.h.b16 %v604
        %v1188 = vunpack.c.l.b16 %v605
        %v1189 = vunpack.c.h.b16 %v605
        %v1190 = vunpack.c.l.b16 %v606
        %v1191 = vunpack.c.h.b16 %v606
        %v1192 = vunpack.c.l.b16 %v607
        %v1193 = vunpack.c.h.b16 %v607
        %v1194 = vunpack.c.l.b16 %v608
        %v1195 = vunpack.c.h.b16 %v608
        %v1196 = vunpack.c.l.b16 %v609
        %v1197 = vunpack.c.h.b16 %v609
        %v1198 = vunpack.c.l.b16 %v610
        %v1199 = vunpack.c.h.b16 %v610
        %v1200 = vunpack.c.l.b16 %v611
        %v1201 = vunpack.c.h.b16 %v611
        %v1202 = vunpack.c.l.b16 %v612
        %v1203 = vunpack.c.h.b16 %v612
        %v1204 = vunpack.c.l.b16 %v613
        %v1205 = vunpack.c.h.b16 %v613
        %v1206 = vunpack.c.l.b16 %v614
        %v1207 = vunpack.c.h.b16 %v614
        %v1208 = vunpack.c.l.b16 %v615
        %v1209 = vunpack.c.h.b16 %v615
        %v1210 = vunpack.c.l.b16 %v616
        %v1211 = vunpack.c.h.b16 %v616
        %v1212 = vunpack.c.l.b16 %v617
        %v1213 = vunpack.c.h.b16 %v617
        %v1214 = vunpack.c.l.b16 %v618
        %v1215 = vunpack.c.h.b16 %v618
        %v1216 = vunpack.c.l.b16 %v619
        %v1217 = vunpack.c.h.b16 %v619
        %v1218 = vunpack.c.l.b16 %v620
        %v1219 = vunpack.c.h.b16 %v620
        %v1220 = vunpack.c.l.b16 %v621
        %v1221 = vunpack.c.h.b16 %v621
        %v1222 = vunpack.c.l.b16 %v622
        %v1223 = vunpack.c.h.b16 %v622
        %v1224 = vunpack.c.l.b16 %v623
        %v1225 = vunpack.c.h.b16 %v623
        %v1226 = vunpack.c.l.b16 %v624
        %v1227 = vunpack.c.h.b16 %v624
        %v1228 = vunpack.c.l.b16 %v625
        %v1229 = vunpack.c.h.b16 %v625
        %v1230 = vunpack.c.l.b16 %v626
        %v1231 = vunpack.c.h.b16 %v626
        %v1232 = vunpack.c.l.b16 %v627
        %v1233 = vunpack.c.h.b16 %v627
        %v1234 = vunpack.c.l.b16 %v628
        %v1235 = vunpack.c.h.b16 %v628
        %v1236 = vunpack.c.l.b16 %v629
        %v1237 = vunpack.c.h.b16 %v629
        %v1238 = vunpack.c.l.b16 %v630
        %v1239 = vunpack.c.h.b16 %v630
        %v1240 = vunpack.c.l.b16 %v631
        %v1241 = vunpack.c.h.b16 %v631
        %v1242 = vunpack.c.l.b16 %v632
        %v1243 = vunpack.c.h.b16 %v632
        %v1244 = vunpack.c.l.b16 %v633
        %v1245 = vunpack.c.h.b16 %v633
        %v1246 = vunpack.c.l.b16 %v634
        %v1247 = vunpack.c.h.b16 %v634
        %v1248 = vunpack.c.l.b16 %v635
        %v1249 = vunpack.c.h.b16 %v635
        %v1250 = vunpack.c.l.b16 %v636
        %v1251 = vunpack.c.h.b16 %v636
        %v1252 = vunpack.c.l.b16 %v637
        %v1253 = vunpack.c.h.b16 %v637
        %v1254 = vunpack.c.l.b16 %v638
        %v1255 = vunpack.c.h.b16 %v638
        %v1256 = vunpack.c.l.b16 %v639
        %v1257 = vunpack.c.h.b16 %v639
        %v1258 = vunpack.c.l.b16 %v640
        %v1259 = vunpack.c.h.b16 %v640
        %v1260 = vunpack.c.l.b16 %v641
        %v1261 = vunpack.c.h.b16 %v641
        %v1262 = vunpack.c.l.b16 %v642
        %v1263 = vunpack.c.h.b16 %v642
        %v1264 = vunpack.c.l.b16 %v643
        %v1265 = vunpack.c.h.b16 %v643
        %v1266 = vunpack.c.l.b16 %v644
        %v1267 = vunpack.c.h.b16 %v644
        %v1268 = vunpack.c.l.b16 %v645
        %v1269 = vunpack.c.h.b16 %v645
        %v1270 = vunpack.c.l.b16 %v646
        %v1271 = vunpack.c.h.b16 %v646
        %v1272 = vunpack.c.l.b16 %v647
        %v1273 = vunpack.c.h.b16 %v647
        %v1274 = vunpack.c.l.b16 %v648
        %v1275 = vunpack.c.h.b16 %v648
        %v1276 = vunpack.c.l.b16 %v649
        %v1277 = vunpack.c.h.b16 %v649
        %v1278 = vunpack.c.l.b16 %v650
        %v1279 = vunpack.c.h.b16 %v650
        %v1280 = vunpack.c.l.b16 %v651
        %v1281 = vunpack.c.h.b16 %v651
        %v1282 = vunpack.c.l.b16 %v652
        %v1283 = vunpack.c.h.b16 %v652
        %v1284 = vunpack.c.l.b16 %v653
        %v1285 = vunpack.c.h.b16 %v653
        %v1286 = vunpack.c.l.b16 %v654
        %v1287 = vunpack.c.h.b16 %v654
        %v1288 = vunpack.c.l.b16 %v655
        %v1289 = vunpack.c.h.b16 %v655
        %v1290 = vunpack.c.l.b16 %v656
        %v1291 = vunpack.c.h.b16 %v656
        %v1292 = vunpack.c.l.b16 %v657
        %v1293 = vunpack.c.h.b16 %v657
        %v1294 = vunpack.c.l.b16 %v658
        %v1295 = vunpack.c.h.b16 %v658
        %v1296 = vunpack.c.l.b16 %v659
        %v1297 = vunpack.c.h.b16 %v659
        %v1298 = vunpack.c.l.b16 %v660
        %v1299 = vunpack.c.h.b16 %v660
        %v1300 = vunpack.c.l.b16 %v661
        %v1301 = vunpack.c.h.b16 %v661
        %v1302 = vunpack.c.l.b16 %v662
        %v1303 = vunpack.c.h.b16 %v662
        %v1304 = vunpack.c.l.b16 %v663
        %v1305 = vunpack.c.h.b16 %v663
        %v1306 = vunpack.c.l.b16 %v664
        %v1307 = vunpack.c.h.b16 %v664
        %v1308 = vunpack.c.l.b16 %v665
        %v1309 = vunpack.c.h.b16 %v665
        %v1310 = vunpack.c.l.b16 %v666
        %v1311 = vunpack.c.h.b16 %v666
        %v1312 = vunpack.c.l.b16 %v667
        %v1313 = vunpack.c.h.b16 %v667
        %v1314 = vunpack.c.l.b16 %v668
        %v1315 = vunpack.c.h.b16 %v668
        %v1316 = vunpack.c.l.b16 %v669
        %v1317 = vunpack.c.h.b16 %v669
        %v1318 = vunpack.c.l.b16 %v670
        %v1319 = vunpack.c.h.b16 %v670
        %v1320 = vunpack.c.l.b16 %v671
        %v1321 = vunpack.c.h.b16 %v671
        %v1322 = vunpack.c.l.b16 %v672
        %v1323 = vunpack.c.h.b16 %v672
        %v1324 = vunpack.c.l.b16 %v673
        %v1325 = vunpack.c.h.b16 %v673
        %v1326 = vunpack.c.l.b16 %v674
        %v1327 = vunpack.c.h.b16 %v674
        %v1328 = vunpack.c.l.b16 %v675
        %v1329 = vunpack.c.h.b16 %v675
        %v1330 = vunpack.c.l.b16 %v676
        %v1331 = vunpack.c.h.b16 %v676
        %v1332 = vunpack.c.l.b16 %v677
        %v1333 = vunpack.c.h.b16 %v677
        %v1334 = vunpack.c.l.b16 %v678
        %v1335 = vunpack.c.h.b16 %v678
        %v1336 = vunpack.c.l.b16 %v679
        %v1337 = vunpack.c.h.b16 %v679
        %v1338 = vunpack.c.l.b16 %v680
        %v1339 = vunpack.c.h.b16 %v680
        %v1340 = vunpack.c.l.b16 %v681
        %v1341 = vunpack.c.h.b16 %v681
        %v1342 = vunpack.c.l.b16 %v682
        %v1343 = vunpack.c.h.b16 %v682
        %v1344 = vunpack.c.l.b16 %v683
        %v1345 = vunpack.c.h.b16 %v683
        %v1346 = vunpack.c.l.b16 %v684
        %v1347 = vunpack.c.h.b16 %v684
        %v1348 = vunpack.c.l.b16 %v685
        %v1349 = vunpack.c.h.b16 %v685
        %v1350 = vunpack.c.l.b16 %v686
        %v1351 = vunpack.c.h.b16 %v686
        %v1352 = vunpack.c.l.b16 %v687
        %v1353 = vunpack.c.h.b16 %v687
        %v1354 = vunpack.c.l.b16 %v688
        %v1355 = vunpack.c.h.b16 %v688
        %v1356 = vunpack.c.l.b16 %v689
        %v1357 = vunpack.c.h.b16 %v689
        %v1358 = vunpack.c.l.b16 %v690
        %v1359 = vunpack.c.h.b16 %v690
        %v1360 = vunpack.c.l.b16 %v691
        %v1361 = vunpack.c.h.b16 %v691
        %v1362 = vunpack.c.l.b16 %v692
        %v1363 = vunpack.c.h.b16 %v692
        %v1364 = vunpack.c.l.b16 %v693
        %v1365 = vunpack.c.h.b16 %v693
        %v1366 = vunpack.c.l.b16 %v694
        %v1367 = vunpack.c.h.b16 %v694
        %v1368 = vunpack.c.l.b16 %v695
        %v1369 = vunpack.c.h.b16 %v695
        %v1370 = vunpack.c.l.b16 %v696
        %v1371 = vunpack.c.h.b16 %v696
        %v1372 = vunpack.c.l.b16 %v697
        %v1373 = vunpack.c.h.b16 %v697
        %v1374 = vunpack.c.l.b16 %v698
        %v1375 = vunpack.c.h.b16 %v698
        %v1376 = vunpack.c.l.b16 %v699
        %v1377 = vunpack.c.h.b16 %v699
        %v1378 = vunpack.c.l.b16 %v700
        %v1379 = vunpack.c.h.b16 %v700
        %v1380 = vunpack.c.l.b16 %v701
        %v1381 = vunpack.c.h.b16 %v701
        %v1382 = vunpack.c.l.b16 %v702
        %v1383 = vunpack.c.h.b16 %v702
        %v1384 = vunpack.c.l.b16 %v703
        %v1385 = vunpack.c.h.b16 %v703
        %v1386 = vunpack.c.l.b16 %v704
        %v1387 = vunpack.c.h.b16 %v704
        %v1388 = vunpack.c.l.b16 %v705
        %v1389 = vunpack.c.h.b16 %v705
        %v1390 = vunpack.c.l.b16 %v706
        %v1391 = vunpack.c.h.b16 %v706
        %v1392 = vunpack.c.l.b16 %v707
        %v1393 = vunpack.c.h.b16 %v707
        %v1394 = vunpack.c.l.b16 %v708
        %v1395 = vunpack.c.h.b16 %v708
        %v1396 = vunpack.c.l.b16 %v709
        %v1397 = vunpack.c.h.b16 %v709
        %v1398 = vunpack.c.l.b16 %v710
        %v1399 = vunpack.c.h.b16 %v710
        %v1400 = vunpack.c.l.b16 %v711
        %v1401 = vunpack.c.h.b16 %v711
        %v1402 = vunpack.c.l.b16 %v712
        %v1403 = vunpack.c.h.b16 %v712
        %v1404 = vunpack.c.l.b16 %v713
        %v1405 = vunpack.c.h.b16 %v713
        %v1406 = vunpack.c.l.b16 %v714
        %v1407 = vunpack.c.h.b16 %v714
        %v1408 = vunpack.c.l.b16 %v715
        %v1409 = vunpack.c.h.b16 %v715
        %v1410 = vunpack.c.l.b16 %v716
        %v1411 = vunpack.c.h.b16 %v716
        %v1412 = vunpack.c.l.b16 %v717
        %v1413 = vunpack.c.h.b16 %v717
        %v1414 = vunpack.c.l.b16 %v718
        %v1415 = vunpack.c.h.b16 %v718
        %v1416 = vunpack.c.l.b16 %v719
        %v1417 = vunpack.c.h.b16 %v719
        %v1418 = vunpack.c.l.b16 %v720
        %v1419 = vunpack.c.h.b16 %v720
        %v1420 = vunpack.c.l.b16 %v721
        %v1421 = vunpack.c.h.b16 %v721
        %v1422 = vunpack.c.l.b16 %v722
        %v1423 = vunpack.c.h.b16 %v722
        %v1424 = vunpack.c.l.b16 %v723
        %v1425 = vunpack.c.h.b16 %v723
        %v1426 = vunpack.c.l.b16 %v724
        %v1427 = vunpack.c.h.b16 %v724
        %v1428 = vunpack.c.l.b16 %v725
        %v1429 = vunpack.c.h.b16 %v725
        %v1430 = vunpack.c.l.b16 %v726
        %v1431 = vunpack.c.h.b16 %v726
        %v1432 = vunpack.c.l.b16 %v727
        %v1433 = vunpack.c.h.b16 %v727
        %v1434 = vunpack.c.l.b16 %v728
        %v1435 = vunpack.c.h.b16 %v728
        %v1436 = vunpack.c.l.b16 %v729
        %v1437 = vunpack.c.h.b16 %v729
        %v1438 = vunpack.c.l.b16 %v730
        %v1439 = vunpack.c.h.b16 %v730
        %v1440 = vunpack.c.l.b16 %v731
        %v1441 = vunpack.c.h.b16 %v731
        %v1442 = vunpack.c.l.b16 %v732
        %v1443 = vunpack.c.h.b16 %v732
        %v1444 = vunpack.c.l.b16 %v733
        %v1445 = vunpack.c.h.b16 %v733
        %v1446 = vunpack.c.l.b16 %v734
        %v1447 = vunpack.c.h.b16 %v734
        %v1448 = vunpack.c.l.b16 %v735
        %v1449 = vunpack.c.h.b16 %v735
        %v1450 = vunpack.c.l.b16 %v736
        %v1451 = vunpack.c.h.b16 %v736
        %v1452 = vunpack.c.l.b16 %v737
        %v1453 = vunpack.c.h.b16 %v737
        %v1454 = vunpack.c.l.b16 %v738
        %v1455 = vunpack.c.h.b16 %v738
        %v1456 = vunpack.c.l.b16 %v739
        %v1457 = vunpack.c.h.b16 %v739
        %v1458 = vunpack.c.l.b16 %v740
        %v1459 = vunpack.c.h.b16 %v740
        %v1460 = vunpack.c.l.b16 %v741
        %v1461 = vunpack.c.h.b16 %v741
        %v1462 = vunpack.c.l.b16 %v742
        %v1463 = vunpack.c.h.b16 %v742
        %v1464 = vunpack.c.l.b16 %v743
        %v1465 = vunpack.c.h.b16 %v743
        %v1466 = vunpack.c.l.b16 %v744
        %v1467 = vunpack.c.h.b16 %v744
        %v1468 = vunpack.c.l.b16 %v745
        %v1469 = vunpack.c.h.b16 %v745
        %v1470 = vunpack.c.l.b16 %v746
        %v1471 = vunpack.c.h.b16 %v746
        %v1472 = vunpack.c.l.b16 %v747
        %v1473 = vunpack.c.h.b16 %v747
        %v1474 = vunpack.c.l.b16 %v748
        %v1475 = vunpack.c.h.b16 %v748
        %v1476 = vunpack.c.l.b16 %v749
        %v1477 = vunpack.c.h.b16 %v749
        %v1478 = vunpack.c.l.b16 %v750
        %v1479 = vunpack.c.h.b16 %v750
        %v1480 = vunpack.c.l.b16 %v751
        %v1481 = vunpack.c.h.b16 %v751
        %v1482 = vunpack.c.l.b16 %v752
        %v1483 = vunpack.c.h.b16 %v752
        %v1484 = vunpack.c.l.b16 %v753
        %v1485 = vunpack.c.h.b16 %v753
        %v1486 = vunpack.c.l.b16 %v754
        %v1487 = vunpack.c.h.b16 %v754
        %v1488 = vunpack.c.l.b16 %v755
        %v1489 = vunpack.c.h.b16 %v755
        %v1490 = vunpack.c.l.b16 %v756
        %v1491 = vunpack.c.h.b16 %v756
        %v1492 = vunpack.c.l.b16 %v757
        %v1493 = vunpack.c.h.b16 %v757
        %v1494 = vunpack.c.l.b16 %v758
        %v1495 = vunpack.c.h.b16 %v758
        %v1496 = vunpack.c.l.b16 %v759
        %v1497 = vunpack.c.h.b16 %v759
        %v1498 = vunpack.c.l.b16 %v760
        %v1499 = vunpack.c.h.b16 %v760
        %v1500 = vunpack.c.l.b16 %v761
        %v1501 = vunpack.c.h.b16 %v761
        %v1502 = vunpack.c.l.b16 %v762
        %v1503 = vunpack.c.h.b16 %v762
        %v1504 = vunpack.c.l.b16 %v763
        %v1505 = vunpack.c.h.b16 %v763
        %v1506 = vunpack.c.l.b16 %v764
        %v1507 = vunpack.c.h.b16 %v764
        %v1508 = vunpack.c.l.b16 %v765
        %v1509 = vunpack.c.h.b16 %v765
        %v1510 = vunpack.c.l.b16 %v766
        %v1511 = vunpack.c.h.b16 %v766
        %v1512 = vunpack.c.l.b16 %v767
        %v1513 = vunpack.c.h.b16 %v767
        %v1514 = vunpack.c.l.b16 %v768
        %v1515 = vunpack.c.h.b16 %v768
        %v1516 = vunpack.c.l.b16 %v769
        %v1517 = vunpack.c.h.b16 %v769
        %v1518 = vunpack.c.l.b16 %v770
        %v1519 = vunpack.c.h.b16 %v770
        %v1520 = vunpack.c.l.b16 %v771
        %v1521 = vunpack.c.h.b16 %v771
        %v1522 = vunpack.c.l.b16 %v772
        %v1523 = vunpack.c.h.b16 %v772
        %v1524 = vunpack.c.l.b16 %v773
        %v1525 = vunpack.c.h.b16 %v773
        %v1526 = vunpack.c.l.b16 %v774
        %v1527 = vunpack.c.h.b16 %v774
        %v1528 = vunpack.c.l.b16 %v775
        %v1529 = vunpack.c.h.b16 %v775
        %v1530 = vunpack.c.l.b16 %v776
        %v1531 = vunpack.c.h.b16 %v776
        %v1532 = vunpack.c.l.b16 %v777
        %v1533 = vunpack.c.h.b16 %v777
        %v1534 = vunpack.c.l.b16 %v778
        %v1535 = vunpack.c.h.b16 %v778
        %v1536 = vunpack.c.l.b16 %v779
        %v1537 = vunpack.c.h.b16 %v779
        %v1538 = vunpack.c.l.b16 %v780
        %v1539 = vunpack.c.h.b16 %v780
        %v1540 = vunpack.c.l.b16 %v781
        %v1541 = vunpack.c.h.b16 %v781
        %v1542 = vunpack.c.l.b16 %v782
        %v1543 = vunpack.c.h.b16 %v782
        %v1544 = vunpack.c.l.b16 %v783
        %v1545 = vunpack.c.h.b16 %v783
        %v1546 = vunpack.c.l.b16 %v784
        %v1547 = vunpack.c.h.b16 %v784
        %v1548 = vunpack.c.l.b16 %v785
        %v1549 = vunpack.c.h.b16 %v785
        %v1550 = vunpack.c.l.b16 %v786
        %v1551 = vunpack.c.h.b16 %v786
        %v1552 = vunpack.c.l.b16 %v787
        %v1553 = vunpack.c.h.b16 %v787
        %v1554 = vunpack.c.l.b16 %v788
        %v1555 = vunpack.c.h.b16 %v788
        %v1556 = vunpack.c.l.b16 %v789
        %v1557 = vunpack.c.h.b16 %v789
        %v1558 = vpack.c.b16 %v1050, %v1046
        %v1559 = vpack.c.b16 %v1051, %v1047
        %v1560 = vpack.c.b16 %v1052, %v1048
        %v1561 = vpack.c.b16 %v1053, %v1049
        %v1562 = vpack.c.b16 %v1058, %v1054
        %v1563 = vpack.c.b16 %v1059, %v1055
        %v1564 = vpack.c.b16 %v1060, %v1056
        %v1565 = vpack.c.b16 %v1061, %v1057
        %v1566 = vpack.c.b16 %v1066, %v1062
        %v1567 = vpack.c.b16 %v1067, %v1063
        %v1568 = vpack.c.b16 %v1068, %v1064
        %v1569 = vpack.c.b16 %v1069, %v1065
        %v1570 = vpack.c.b16 %v1074, %v1070
        %v1571 = vpack.c.b16 %v1075, %v1071
        %v1572 = vpack.c.b16 %v1076, %v1072
        %v1573 = vpack.c.b16 %v1077, %v1073
        %v1574 = vpack.c.b16 %v1082, %v1078
        %v1575 = vpack.c.b16 %v1083, %v1079
        %v1576 = vpack.c.b16 %v1084, %v1080
        %v1577 = vpack.c.b16 %v1085, %v1081
        %v1578 = vpack.c.b16 %v1090, %v1086
        %v1579 = vpack.c.b16 %v1091, %v1087
        %v1580 = vpack.c.b16 %v1092, %v1088
        %v1581 = vpack.c.b16 %v1093, %v1089
        %v1582 = vpack.c.b16 %v1098, %v1094
        %v1583 = vpack.c.b16 %v1099, %v1095
        %v1584 = vpack.c.b16 %v1100, %v1096
        %v1585 = vpack.c.b16 %v1101, %v1097
        %v1586 = vpack.c.b16 %v1106, %v1102
        %v1587 = vpack.c.b16 %v1107, %v1103
        %v1588 = vpack.c.b16 %v1108, %v1104
        %v1589 = vpack.c.b16 %v1109, %v1105
        %v1590 = vpack.c.b16 %v1114, %v1110
        %v1591 = vpack.c.b16 %v1115, %v1111
        %v1592 = vpack.c.b16 %v1116, %v1112
        %v1593 = vpack.c.b16 %v1117, %v1113
        %v1594 = vpack.c.b16 %v1122, %v1118
        %v1595 = vpack.c.b16 %v1123, %v1119
        %v1596 = vpack.c.b16 %v1124, %v1120
        %v1597 = vpack.c.b16 %v1125, %v1121
        %v1598 = vpack.c.b16 %v1130, %v1126
        %v1599 = vpack.c.b16 %v1131, %v1127
        %v1600 = vpack.c.b16 %v1132, %v1128
        %v1601 = vpack.c.b16 %v1133, %v1129
        %v1602 = vpack.c.b16 %v1138, %v1134
        %v1603 = vpack.c.b16 %v1139, %v1135
        %v1604 = vpack.c.b16 %v1140, %v1136
        %v1605 = vpack.c.b16 %v1141, %v1137
        %v1606 = vpack.c.b16 %v1146, %v1142
        %v1607 = vpack.c.b16 %v1147, %v1143
        %v1608 = vpack.c.b16 %v1148, %v1144
        %v1609 = vpack.c.b16 %v1149, %v1145
        %v1610 = vpack.c.b16 %v1154, %v1150
        %v1611 = vpack.c.b16 %v1155, %v1151
        %v1612 = vpack.c.b16 %v1156, %v1152
        %v1613 = vpack.c.b16 %v1157, %v1153
        %v1614 = vpack.c.b16 %v1162, %v1158
        %v1615 = vpack.c.b16 %v1163, %v1159
        %v1616 = vpack.c.b16 %v1164, %v1160
        %v1617 = vpack.c.b16 %v1165, %v1161
        %v1618 = vpack.c.b16 %v1170, %v1166
        %v1619 = vpack.c.b16 %v1171, %v1167
        %v1620 = vpack.c.b16 %v1172, %v1168
        %v1621 = vpack.c.b16 %v1173, %v1169
        %v1622 = vpack.c.b16 %v1178, %v1174
        %v1623 = vpack.c.b16 %v1179, %v1175
        %v1624 = vpack.c.b16 %v1180, %v1176
        %v1625 = vpack.c.b16 %v1181, %v1177
        %v1626 = vpack.c.b16 %v1186, %v1182
        %v1627 = vpack.c.b16 %v1187, %v1183
        %v1628 = vpack.c.b16 %v1188, %v1184
        %v1629 = vpack.c.b16 %v1189, %v1185
        %v1630 = vpack.c.b16 %v1194, %v1190
        %v1631 = vpack.c.b16 %v1195, %v1191
        %v1632 = vpack.c.b16 %v1196, %v1192
        %v1633 = vpack.c.b16 %v1197, %v1193
        %v1634 = vpack.c.b16 %v1202, %v1198
        %v1635 = vpack.c.b16 %v1203, %v1199
        %v1636 = vpack.c.b16 %v1204, %v1200
        %v1637 = vpack.c.b16 %v1205, %v1201
        %v1638 = vpack.c.b16 %v1210, %v1206
        %v1639 = vpack.c.b16 %v1211, %v1207
        %v1640 = vpack.c.b16 %v1212, %v1208
        %v1641 = vpack.c.b16 %v1213, %v1209
        %v1642 = vpack.c.b16 %v1218, %v1214
        %v1643 = vpack.c.b16 %v1219, %v1215
        %v1644 = vpack.c.b16 %v1220, %v1216
        %v1645 = vpack.c.b16 %v1221, %v1217
        %v1646 = vpack.c.b16 %v1226, %v1222
        %v1647 = vpack.c.b16 %v1227, %v1223
        %v1648 = vpack.c.b16 %v1228, %v1224
        %v1649 = vpack.c.b16 %v1229, %v1225
        %v1650 = vpack.c.b16 %v1234, %v1230
        %v1651 = vpack.c.b16 %v1235, %v1231
        %v1652 = vpack.c.b16 %v1236, %v1232
        %v1653 = vpack.c.b16 %v1237, %v1233
        %v1654 = vpack.c.b16 %v1242, %v1238
        %v1655 = vpack.c.b16 %v1243, %v1239
        %v1656 = vpack.c.b16 %v1244, %v1240
        %v1657 = vpack.c.b16 %v1245, %v1241
        %v1658 = vpack.c.b16 %v1250, %v1246
        %v1659 = vpack.c.b16 %v1251, %v1247
        %v1660 = vpack.c.b16 %v1252, %v1248
        %v1661 = vpack.c.b16 %v1253, %v1249
        %v1662 = vpack.c.b16 %v1258, %v1254
        %v1663 = vpack.c.b16 %v1259, %v1255
        %v1664 = vpack.c.b16 %v1260, %v1256
        %v1665 = vpack.c.b16 %v1261, %v1257
        %v1666 = vpack.c.b16 %v1266, %v1262
        %v1667 = vpack.c.b16 %v1267, %v1263
        %v1668 = vpack.c.b16 %v1268, %v1264
        %v1669 = vpack.c.b16 %v1269, %v1265
        %v1670 = vpack.c.b16 %v1274, %v1270
        %v1671 = vpack.c.b16 %v1275, %v1271
        %v1672 = vpack.c.b16 %v1276, %v1272
        %v1673 = vpack.c.b16 %v1277, %v1273
        %v1674 = vpack.c.b16 %v1282, %v1278
        %v1675 = vpack.c.b16 %v1283, %v1279
        %v1676 = vpack.c.b16 %v1284, %v1280
        %v1677 = vpack.c.b16 %v1285, %v1281
        %v1678 = vpack.c.b16 %v1290, %v1286
        %v1679 = vpack.c.b16 %v1291, %v1287
        %v1680 = vpack.c.b16 %v1292, %v1288
        %v1681 = vpack.c.b16 %v1293, %v1289
        %v1682 = vpack.c.b16 %v1298, %v1294
        %v1683 = vpack.c.b16 %v1299, %v1295
        %v1684 = vpack.c.b16 %v1300, %v1296
        %v1685 = vpack.c.b16 %v1301, %v1297
        %v1686 = vpack.c.b16 %v1306, %v1302
        %v1687 = vpack.c.b16 %v1307, %v1303
        %v1688 = vpack.c.b16 %v1308, %v1304
        %v1689 = vpack.c.b16 %v1309, %v1305
        %v1690 = vpack.c.b16 %v1314, %v1310
        %v1691 = vpack.c.b16 %v1315, %v1311
        %v1692 = vpack.c.b16 %v1316, %v1312
        %v1693 = vpack.c.b16 %v1317, %v1313
        %v1694 = vpack.c.b16 %v1322, %v1318
        %v1695 = vpack.c.b16 %v1323, %v1319
        %v1696 = vpack.c.b16 %v1324, %v1320
        %v1697 = vpack.c.b16 %v1325, %v1321
        %v1698 = vpack.c.b16 %v1330, %v1326
        %v1699 = vpack.c.b16 %v1331, %v1327
        %v1700 = vpack.c.b16 %v1332, %v1328
        %v1701 = vpack.c.b16 %v1333, %v1329
        %v1702 = vpack.c.b16 %v1338, %v1334
        %v1703 = vpack.c.b16 %v1339, %v1335
        %v1704 = vpack.c.b16 %v1340, %v1336
        %v1705 = vpack.c.b16 %v1341, %v1337
        %v1706 = vpack.c.b16 %v1346, %v1342
        %v1707 = vpack.c.b16 %v1347, %v1343
        %v1708 = vpack.c.b16 %v1348, %v1344
        %v1709 = vpack.c.b16 %v1349, %v1345
        %v1710 = vpack.c.b16 %v1354, %v1350
        %v1711 = vpack.c.b16 %v1355, %v1351
        %v1712 = vpack.c.b16 %v1356, %v1352
        %v1713 = vpack.c.b16 %v1357, %v1353
        %v1714 = vpack.c.b16 %v1362, %v1358
        %v1715 = vpack.c.b16 %v1363, %v1359
        %v1716 = vpack.c.b16 %v1364, %v1360
        %v1717 = vpack.c.b16 %v1365, %v1361
        %v1718 = vpack.c.b16 %v1370, %v1366
        %v1719 = vpack.c.b16 %v1371, %v1367
        %v1720 = vpack.c.b16 %v1372, %v1368
        %v1721 = vpack.c.b16 %v1373, %v1369
        %v1722 = vpack.c.b16 %v1378, %v1374
        %v1723 = vpack.c.b16 %v1379, %v1375
        %v1724 = vpack.c.b16 %v1380, %v1376
        %v1725 = vpack.c.b16 %v1381, %v1377
        %v1726 = vpack.c.b16 %v1386, %v1382
        %v1727 = vpack.c.b16 %v1387, %v1383
        %v1728 = vpack.c.b16 %v1388, %v1384
        %v1729 = vpack.c.b16 %v1389, %v1385
        %v1730 = vpack.c.b16 %v1394, %v1390
        %v1731 = vpack.c.b16 %v1395, %v1391
        %v1732 = vpack.c.b16 %v1396, %v1392
        %v1733 = vpack.c.b16 %v1397, %v1393
        %v1734 = vpack.c.b16 %v1402, %v1398
        %v1735 = vpack.c.b16 %v1403, %v1399
        %v1736 = vpack.c.b16 %v1404, %v1400
        %v1737 = vpack.c.b16 %v1405, %v1401
        %v1738 = vpack.c.b16 %v1410, %v1406
        %v1739 = vpack.c.b16 %v1411, %v1407
        %v1740 = vpack.c.b16 %v1412, %v1408
        %v1741 = vpack.c.b16 %v1413, %v1409
        %v1742 = vpack.c.b16 %v1418, %v1414
        %v1743 = vpack.c.b16 %v1419, %v1415
        %v1744 = vpack.c.b16 %v1420, %v1416
        %v1745 = vpack.c.b16 %v1421, %v1417
        %v1746 = vpack.c.b16 %v1426, %v1422
        %v1747 = vpack.c.b16 %v1427, %v1423
        %v1748 = vpack.c.b16 %v1428, %v1424
        %v1749 = vpack.c.b16 %v1429, %v1425
        %v1750 = vpack.c.b16 %v1434, %v1430
        %v1751 = vpack.c.b16 %v1435, %v1431
        %v1752 = vpack.c.b16 %v1436, %v1432
        %v1753 = vpack.c.b16 %v1437, %v1433
        %v1754 = vpack.c.b16 %v1442, %v1438
        %v1755 = vpack.c.b16 %v1443, %v1439
        %v1756 = vpack.c.b16 %v1444, %v1440
        %v1757 = vpack.c.b16 %v1445, %v1441
        %v1758 = vpack.c.b16 %v1450, %v1446
        %v1759 = vpack.c.b16 %v1451, %v1447
        %v1760 = vpack.c.b16 %v1452, %v1448
        %v1761 = vpack.c.b16 %v1453, %v1449
        %v1762 = vpack.c.b16 %v1458, %v1454
        %v1763 = vpack.c.b16 %v1459, %v1455
        %v1764 = vpack.c.b16 %v1460, %v1456
        %v1765 = vpack.c.b16 %v1461, %v1457
        %v1766 = vpack.c.b16 %v1466, %v1462
        %v1767 = vpack.c.b16 %v1467, %v1463
        %v1768 = vpack.c.b16 %v1468, %v1464
        %v1769 = vpack.c.b16 %v1469, %v1465
        %v1770 = vpack.c.b16 %v1474, %v1470
        %v1771 = vpack.c.b16 %v1475, %v1471
        %v1772 = vpack.c.b16 %v1476, %v1472
        %v1773 = vpack.c.b16 %v1477, %v1473
        %v1774 = vpack.c.b16 %v1482, %v1478
        %v1775 = vpack.c.b16 %v1483, %v1479
        %v1776 = vpack.c.b16 %v1484, %v1480
        %v1777 = vpack.c.b16 %v1485, %v1481
        %v1778 = vpack.c.b16 %v1490, %v1486
        %v1779 = vpack.c.b16 %v1491, %v1487
        %v1780 = vpack.c.b16 %v1492, %v1488
        %v1781 = vpack.c.b16 %v1493, %v1489
        %v1782 = vpack.c.b16 %v1498, %v1494
        %v1783 = vpack.c.b16 %v1499, %v1495
        %v1784 = vpack.c.b16 %v1500, %v1496
        %v1785 = vpack.c.b16 %v1501, %v1497
        %v1786 = vpack.c.b16 %v1506, %v1502
        %v1787 = vpack.c.b16 %v1507, %v1503
        %v1788 = vpack.c.b16 %v1508, %v1504
        %v1789 = vpack.c.b16 %v1509, %v1505
        %v1790 = vpack.c.b16 %v1514, %v1510
        %v1791 = vpack.c.b16 %v1515, %v1511
        %v1792 = vpack.c.b16 %v1516, %v1512
        %v1793 = vpack.c.b16 %v1517, %v1513
        %v1794 = vpack.c.b16 %v1522, %v1518
        %v1795 = vpack.c.b16 %v1523, %v1519
        %v1796 = vpack.c.b16 %v1524, %v1520
        %v1797 = vpack.c.b16 %v1525, %v1521
        %v1798 = vpack.c.b16 %v1530, %v1526
        %v1799 = vpack.c.b16 %v1531, %v1527
        %v1800 = vpack.c.b16 %v1532, %v1528
        %v1801 = vpack.c.b16 %v1533, %v1529
        %v1802 = vpack.c.b16 %v1538, %v1534
        %v1803 = vpack.c.b16 %v1539, %v1535
        %v1804 = vpack.c.b16 %v1540, %v1536
        %v1805 = vpack.c.b16 %v1541, %v1537
        %v1806 = vpack.c.b16 %v1546, %v1542
        %v1807 = vpack.c.b16 %v1547, %v1543
        %v1808 = vpack.c.b16 %v1548, %v1544
        %v1809 = vpack.c.b16 %v1549, %v1545
        %v1810 = vpack.c.b16 %v1554, %v1550
        %v1811 = vpack.c.b16 %v1555, %v1551
        %v1812 = vpack.c.b16 %v1556, %v1552
        %v1813 = vpack.c.b16 %v1557, %v1553
        %2070 = vmatpush.bf16.msra.mxu0 %v1586
        %2071 = vmatpush.bf16.msra.mxu0 %v1582
        %2072 = vmatpush.bf16.msra.mxu0 %v1578
        %2073 = vmatpush.bf16.msra.mxu0 %v1574
        %2074 = vmatpush.bf16.msra.mxu0 %v1570
        %2075 = vmatpush.bf16.msra.mxu0 %v1566
        %2076 = vmatpush.bf16.msra.mxu0 %v1562
        %2077 = vmatpush.bf16.msra.mxu0 %v1558
        %2078 = vmatmul.bf16.gmra.mxu0 %v518
        %v2079 = vpop.f32.mrf.mxu0
        %v2080 = vadd.f32 0.0, %v2079
        %v2081 = vpop.f32.mrf.mxu0
        %v2082 = vadd.f32 0.0, %v2081
        %2083 = vmatmul.bf16.gmra.mxu0 %v526
        %v2084 = vpop.f32.mrf.mxu0
        %v2085 = vadd.f32 0.0, %v2084
        %v2086 = vpop.f32.mrf.mxu0
        %2087 = vdwg.mxu0
        %2088 = vmatpush.bf16.msra.mxu0 %v1618
        %2089 = vmatpush.bf16.msra.mxu0 %v1614
        %2090 = vmatpush.bf16.msra.mxu0 %v1610
        %2091 = vmatpush.bf16.msra.mxu0 %v1606
        %2092 = vmatpush.bf16.msra.mxu0 %v1602
        %2093 = vmatpush.bf16.msra.mxu0 %v1598
        %2094 = vmatpush.bf16.msra.mxu0 %v1594
        %2095 = vmatpush.bf16.msra.mxu0 %v1590
        %2096 = vmatmul.bf16.gmra.mxu0 %v519
        %v2097 = vpop.f32.mrf.mxu0
        %v2098 = vadd.f32 %v2080, %v2097
        %v2099 = vpop.f32.mrf.mxu0
        %v2100 = vadd.f32 %v2082, %v2099
        %2101 = vmatmul.bf16.gmra.mxu0 %v527
        %v2102 = vpop.f32.mrf.mxu0
        %v2103 = vadd.f32 %v2085, %v2102
        %v2104 = vpop.f32.mrf.mxu0
        %2105 = vdwg.mxu0
        %2106 = vmatpush.bf16.msra.mxu0 %v1650
        %2107 = vmatpush.bf16.msra.mxu0 %v1646
        %2108 = vmatpush.bf16.msra.mxu0 %v1642
        %2109 = vmatpush.bf16.msra.mxu0 %v1638
        %2110 = vmatpush.bf16.msra.mxu0 %v1634
        %2111 = vmatpush.bf16.msra.mxu0 %v1630
        %2112 = vmatpush.bf16.msra.mxu0 %v1626
        %2113 = vmatpush.bf16.msra.mxu0 %v1622
        %2114 = vmatmul.bf16.gmra.mxu0 %v520
        %v2115 = vpop.f32.mrf.mxu0
        %v2116 = vadd.f32 %v2098, %v2115
        %v2117 = vpop.f32.mrf.mxu0
        %v2118 = vadd.f32 %v2100, %v2117
        %2119 = vmatmul.bf16.gmra.mxu0 %v528
        %v2120 = vpop.f32.mrf.mxu0
        %v2121 = vadd.f32 %v2103, %v2120
        %v2122 = vpop.f32.mrf.mxu0
        %2123 = vdwg.mxu0
        %2124 = vmatpush.bf16.msra.mxu0 %v1682
        %2125 = vmatpush.bf16.msra.mxu0 %v1678
        %2126 = vmatpush.bf16.msra.mxu0 %v1674
        %2127 = vmatpush.bf16.msra.mxu0 %v1670
        %2128 = vmatpush.bf16.msra.mxu0 %v1666
        %2129 = vmatpush.bf16.msra.mxu0 %v1662
        %2130 = vmatpush.bf16.msra.mxu0 %v1658
        %2131 = vmatpush.bf16.msra.mxu0 %v1654
        %2132 = vmatmul.bf16.gmra.mxu0 %v521
        %v2133 = vpop.f32.mrf.mxu0
        %v2134 = vadd.f32 %v2116, %v2133
        %v2135 = vpop.f32.mrf.mxu0
        %v2136 = vadd.f32 %v2118, %v2135
        %2137 = vmatmul.bf16.gmra.mxu0 %v529
        %v2138 = vpop.f32.mrf.mxu0
        %v2139 = vadd.f32 %v2121, %v2138
        %v2140 = vpop.f32.mrf.mxu0
        %2141 = vdwg.mxu0
        %2142 = vmatpush.bf16.msra.mxu0 %v1714
        %2143 = vmatpush.bf16.msra.mxu0 %v1710
        %2144 = vmatpush.bf16.msra.mxu0 %v1706
        %2145 = vmatpush.bf16.msra.mxu0 %v1702
        %2146 = vmatpush.bf16.msra.mxu0 %v1698
        %2147 = vmatpush.bf16.msra.mxu0 %v1694
        %2148 = vmatpush.bf16.msra.mxu0 %v1690
        %2149 = vmatpush.bf16.msra.mxu0 %v1686
        %2150 = vmatmul.bf16.gmra.mxu0 %v522
        %v2151 = vpop.f32.mrf.mxu0
        %v2152 = vadd.f32 %v2134, %v2151
        %v2153 = vpop.f32.mrf.mxu0
        %v2154 = vadd.f32 %v2136, %v2153
        %2155 = vmatmul.bf16.gmra.mxu0 %v530
        %v2156 = vpop.f32.mrf.mxu0
        %v2157 = vadd.f32 %v2139, %v2156
        %v2158 = vpop.f32.mrf.mxu0
        %2159 = vdwg.mxu0
        %2160 = vmatpush.bf16.msra.mxu0 %v1746
        %2161 = vmatpush.bf16.msra.mxu0 %v1742
        %2162 = vmatpush.bf16.msra.mxu0 %v1738
        %2163 = vmatpush.bf16.msra.mxu0 %v1734
        %2164 = vmatpush.bf16.msra.mxu0 %v1730
        %2165 = vmatpush.bf16.msra.mxu0 %v1726
        %2166 = vmatpush.bf16.msra.mxu0 %v1722
        %2167 = vmatpush.bf16.msra.mxu0 %v1718
        %2168 = vmatmul.bf16.gmra.mxu0 %v523
        %v2169 = vpop.f32.mrf.mxu0
        %v2170 = vadd.f32 %v2152, %v2169
        %v2171 = vpop.f32.mrf.mxu0
        %v2172 = vadd.f32 %v2154, %v2171
        %2173 = vmatmul.bf16.gmra.mxu0 %v531
        %v2174 = vpop.f32.mrf.mxu0
        %v2175 = vadd.f32 %v2157, %v2174
        %v2176 = vpop.f32.mrf.mxu0
        %2177 = vdwg.mxu0
        %2178 = vmatpush.bf16.msra.mxu0 %v1778
        %2179 = vmatpush.bf16.msra.mxu0 %v1774
        %2180 = vmatpush.bf16.msra.mxu0 %v1770
        %2181 = vmatpush.bf16.msra.mxu0 %v1766
        %2182 = vmatpush.bf16.msra.mxu0 %v1762
        %2183 = vmatpush.bf16.msra.mxu0 %v1758
        %2184 = vmatpush.bf16.msra.mxu0 %v1754
        %2185 = vmatpush.bf16.msra.mxu0 %v1750
        %2186 = vmatmul.bf16.gmra.mxu0 %v524
        %v2187 = vpop.f32.mrf.mxu0
        %v2188 = vadd.f32 %v2170, %v2187
        %v2189 = vpop.f32.mrf.mxu0
        %v2190 = vadd.f32 %v2172, %v2189
        %2191 = vmatmul.bf16.gmra.mxu0 %v532
        %v2192 = vpop.f32.mrf.mxu0
        %v2193 = vadd.f32 %v2175, %v2192
        %v2194 = vpop.f32.mrf.mxu0
        %2195 = vdwg.mxu0
        %2196 = vmatpush.bf16.msra.mxu0 %v1810
        %2197 = vmatpush.bf16.msra.mxu0 %v1806
        %2198 = vmatpush.bf16.msra.mxu0 %v1802
        %2199 = vmatpush.bf16.msra.mxu0 %v1798
        %2200 = vmatpush.bf16.msra.mxu0 %v1794
        %2201 = vmatpush.bf16.msra.mxu0 %v1790
        %2202 = vmatpush.bf16.msra.mxu0 %v1786
        %2203 = vmatpush.bf16.msra.mxu0 %v1782
        %2204 = vmatmul.bf16.gmra.mxu0 %v525
        %v2205 = vpop.f32.mrf.mxu0
        %v2206 = vadd.f32 %v2188, %v2205
        %v2207 = vpop.f32.mrf.mxu0
        %v2208 = vadd.f32 %v2190, %v2207
        %2209 = vmatmul.bf16.gmra.mxu0 %v533
        %v2210 = vpop.f32.mrf.mxu0
        %v2211 = vadd.f32 %v2193, %v2210
        %v2212 = vpop.f32.mrf.mxu0
        %2213 = vdwg.mxu0
        %2214 = vmatpush.bf16.msra.mxu0 %v1587
        %2215 = vmatpush.bf16.msra.mxu0 %v1583
        %2216 = vmatpush.bf16.msra.mxu0 %v1579
        %2217 = vmatpush.bf16.msra.mxu0 %v1575
        %2218 = vmatpush.bf16.msra.mxu0 %v1571
        %2219 = vmatpush.bf16.msra.mxu0 %v1567
        %2220 = vmatpush.bf16.msra.mxu0 %v1563
        %2221 = vmatpush.bf16.msra.mxu0 %v1559
        %2222 = vmatmul.bf16.gmra.mxu0 %v518
        %v2223 = vpop.f32.mrf.mxu0
        %v2224 = vadd.f32 0.0, %v2223
        %v2225 = vpop.f32.mrf.mxu0
        %v2226 = vadd.f32 0.0, %v2225
        %2227 = vmatmul.bf16.gmra.mxu0 %v526
        %v2228 = vpop.f32.mrf.mxu0
        %v2229 = vadd.f32 0.0, %v2228
        %v2230 = vpop.f32.mrf.mxu0
        %2231 = vdwg.mxu0
        %2232 = vmatpush.bf16.msra.mxu0 %v1619
        %2233 = vmatpush.bf16.msra.mxu0 %v1615
        %2234 = vmatpush.bf16.msra.mxu0 %v1611
        %2235 = vmatpush.bf16.msra.mxu0 %v1607
        %2236 = vmatpush.bf16.msra.mxu0 %v1603
        %2237 = vmatpush.bf16.msra.mxu0 %v1599
        %2238 = vmatpush.bf16.msra.mxu0 %v1595
        %2239 = vmatpush.bf16.msra.mxu0 %v1591
        %2240 = vmatmul.bf16.gmra.mxu0 %v519
        %v2241 = vpop.f32.mrf.mxu0
        %v2242 = vadd.f32 %v2224, %v2241
        %v2243 = vpop.f32.mrf.mxu0
        %v2244 = vadd.f32 %v2226, %v2243
        %2245 = vmatmul.bf16.gmra.mxu0 %v527
        %v2246 = vpop.f32.mrf.mxu0
        %v2247 = vadd.f32 %v2229, %v2246
        %v2248 = vpop.f32.mrf.mxu0
        %2249 = vdwg.mxu0
        %2250 = vmatpush.bf16.msra.mxu0 %v1651
        %2251 = vmatpush.bf16.msra.mxu0 %v1647
        %2252 = vmatpush.bf16.msra.mxu0 %v1643
        %2253 = vmatpush.bf16.msra.mxu0 %v1639
        %2254 = vmatpush.bf16.msra.mxu0 %v1635
        %2255 = vmatpush.bf16.msra.mxu0 %v1631
        %2256 = vmatpush.bf16.msra.mxu0 %v1627
        %2257 = vmatpush.bf16.msra.mxu0 %v1623
        %2258 = vmatmul.bf16.gmra.mxu0 %v520
        %v2259 = vpop.f32.mrf.mxu0
        %v2260 = vadd.f32 %v2242, %v2259
        %v2261 = vpop.f32.mrf.mxu0
        %v2262 = vadd.f32 %v2244, %v2261
        %2263 = vmatmul.bf16.gmra.mxu0 %v528
        %v2264 = vpop.f32.mrf.mxu0
        %v2265 = vadd.f32 %v2247, %v2264
        %v2266 = vpop.f32.mrf.mxu0
        %2267 = vdwg.mxu0
        %2268 = vmatpush.bf16.msra.mxu0 %v1683
        %2269 = vmatpush.bf16.msra.mxu0 %v1679
        %2270 = vmatpush.bf16.msra.mxu0 %v1675
        %2271 = vmatpush.bf16.msra.mxu0 %v1671
        %2272 = vmatpush.bf16.msra.mxu0 %v1667
        %2273 = vmatpush.bf16.msra.mxu0 %v1663
        %2274 = vmatpush.bf16.msra.mxu0 %v1659
        %2275 = vmatpush.bf16.msra.mxu0 %v1655
        %2276 = vmatmul.bf16.gmra.mxu0 %v521
        %v2277 = vpop.f32.mrf.mxu0
        %v2278 = vadd.f32 %v2260, %v2277
        %v2279 = vpop.f32.mrf.mxu0
        %v2280 = vadd.f32 %v2262, %v2279
        %2281 = vmatmul.bf16.gmra.mxu0 %v529
        %v2282 = vpop.f32.mrf.mxu0
        %v2283 = vadd.f32 %v2265, %v2282
        %v2284 = vpop.f32.mrf.mxu0
        %2285 = vdwg.mxu0
        %2286 = vmatpush.bf16.msra.mxu0 %v1715
        %2287 = vmatpush.bf16.msra.mxu0 %v1711
        %2288 = vmatpush.bf16.msra.mxu0 %v1707
        %2289 = vmatpush.bf16.msra.mxu0 %v1703
        %2290 = vmatpush.bf16.msra.mxu0 %v1699
        %2291 = vmatpush.bf16.msra.mxu0 %v1695
        %2292 = vmatpush.bf16.msra.mxu0 %v1691
        %2293 = vmatpush.bf16.msra.mxu0 %v1687
        %2294 = vmatmul.bf16.gmra.mxu0 %v522
        %v2295 = vpop.f32.mrf.mxu0
        %v2296 = vadd.f32 %v2278, %v2295
        %v2297 = vpop.f32.mrf.mxu0
        %v2298 = vadd.f32 %v2280, %v2297
        %2299 = vmatmul.bf16.gmra.mxu0 %v530
        %v2300 = vpop.f32.mrf.mxu0
        %v2301 = vadd.f32 %v2283, %v2300
        %v2302 = vpop.f32.mrf.mxu0
        %2303 = vdwg.mxu0
        %2304 = vmatpush.bf16.msra.mxu0 %v1747
        %2305 = vmatpush.bf16.msra.mxu0 %v1743
        %2306 = vmatpush.bf16.msra.mxu0 %v1739
        %2307 = vmatpush.bf16.msra.mxu0 %v1735
        %2308 = vmatpush.bf16.msra.mxu0 %v1731
        %2309 = vmatpush.bf16.msra.mxu0 %v1727
        %2310 = vmatpush.bf16.msra.mxu0 %v1723
        %2311 = vmatpush.bf16.msra.mxu0 %v1719
        %2312 = vmatmul.bf16.gmra.mxu0 %v523
        %v2313 = vpop.f32.mrf.mxu0
        %v2314 = vadd.f32 %v2296, %v2313
        %v2315 = vpop.f32.mrf.mxu0
        %v2316 = vadd.f32 %v2298, %v2315
        %2317 = vmatmul.bf16.gmra.mxu0 %v531
        %v2318 = vpop.f32.mrf.mxu0
        %v2319 = vadd.f32 %v2301, %v2318
        %v2320 = vpop.f32.mrf.mxu0
        %2321 = vdwg.mxu0
        %2322 = vmatpush.bf16.msra.mxu0 %v1779
        %2323 = vmatpush.bf16.msra.mxu0 %v1775
        %2324 = vmatpush.bf16.msra.mxu0 %v1771
        %2325 = vmatpush.bf16.msra.mxu0 %v1767
        %2326 = vmatpush.bf16.msra.mxu0 %v1763
        %2327 = vmatpush.bf16.msra.mxu0 %v1759
        %2328 = vmatpush.bf16.msra.mxu0 %v1755
        %2329 = vmatpush.bf16.msra.mxu0 %v1751
        %2330 = vmatmul.bf16.gmra.mxu0 %v524
        %v2331 = vpop.f32.mrf.mxu0
        %v2332 = vadd.f32 %v2314, %v2331
        %v2333 = vpop.f32.mrf.mxu0
        %v2334 = vadd.f32 %v2316, %v2333
        %2335 = vmatmul.bf16.gmra.mxu0 %v532
        %v2336 = vpop.f32.mrf.mxu0
        %v2337 = vadd.f32 %v2319, %v2336
        %v2338 = vpop.f32.mrf.mxu0
        %2339 = vdwg.mxu0
        %2340 = vmatpush.bf16.msra.mxu0 %v1811
        %2341 = vmatpush.bf16.msra.mxu0 %v1807
        %2342 = vmatpush.bf16.msra.mxu0 %v1803
        %2343 = vmatpush.bf16.msra.mxu0 %v1799
        %2344 = vmatpush.bf16.msra.mxu0 %v1795
        %2345 = vmatpush.bf16.msra.mxu0 %v1791
        %2346 = vmatpush.bf16.msra.mxu0 %v1787
        %2347 = vmatpush.bf16.msra.mxu0 %v1783
        %2348 = vmatmul.bf16.gmra.mxu0 %v525
        %v2349 = vpop.f32.mrf.mxu0
        %v2350 = vadd.f32 %v2332, %v2349
        %v2351 = vpop.f32.mrf.mxu0
        %v2352 = vadd.f32 %v2334, %v2351
        %2353 = vmatmul.bf16.gmra.mxu0 %v533
        %v2354 = vpop.f32.mrf.mxu0
        %v2355 = vadd.f32 %v2337, %v2354
        %v2356 = vpop.f32.mrf.mxu0
        %2357 = vdwg.mxu0
        %2358 = vmatpush.bf16.msra.mxu0 %v1588
        %2359 = vmatpush.bf16.msra.mxu0 %v1584
        %2360 = vmatpush.bf16.msra.mxu0 %v1580
        %2361 = vmatpush.bf16.msra.mxu0 %v1576
        %2362 = vmatpush.bf16.msra.mxu0 %v1572
        %2363 = vmatpush.bf16.msra.mxu0 %v1568
        %2364 = vmatpush.bf16.msra.mxu0 %v1564
        %2365 = vmatpush.bf16.msra.mxu0 %v1560
        %2366 = vmatmul.bf16.gmra.mxu0 %v518
        %v2367 = vpop.f32.mrf.mxu0
        %v2368 = vadd.f32 0.0, %v2367
        %v2369 = vpop.f32.mrf.mxu0
        %v2370 = vadd.f32 0.0, %v2369
        %2371 = vmatmul.bf16.gmra.mxu0 %v526
        %v2372 = vpop.f32.mrf.mxu0
        %v2373 = vadd.f32 0.0, %v2372
        %v2374 = vpop.f32.mrf.mxu0
        %2375 = vdwg.mxu0
        %2376 = vmatpush.bf16.msra.mxu0 %v1620
        %2377 = vmatpush.bf16.msra.mxu0 %v1616
        %2378 = vmatpush.bf16.msra.mxu0 %v1612
        %2379 = vmatpush.bf16.msra.mxu0 %v1608
        %2380 = vmatpush.bf16.msra.mxu0 %v1604
        %2381 = vmatpush.bf16.msra.mxu0 %v1600
        %2382 = vmatpush.bf16.msra.mxu0 %v1596
        %2383 = vmatpush.bf16.msra.mxu0 %v1592
        %2384 = vmatmul.bf16.gmra.mxu0 %v519
        %v2385 = vpop.f32.mrf.mxu0
        %v2386 = vadd.f32 %v2368, %v2385
        %v2387 = vpop.f32.mrf.mxu0
        %v2388 = vadd.f32 %v2370, %v2387
        %2389 = vmatmul.bf16.gmra.mxu0 %v527
        %v2390 = vpop.f32.mrf.mxu0
        %v2391 = vadd.f32 %v2373, %v2390
        %v2392 = vpop.f32.mrf.mxu0
        %2393 = vdwg.mxu0
        %2394 = vmatpush.bf16.msra.mxu0 %v1652
        %2395 = vmatpush.bf16.msra.mxu0 %v1648
        %2396 = vmatpush.bf16.msra.mxu0 %v1644
        %2397 = vmatpush.bf16.msra.mxu0 %v1640
        %2398 = vmatpush.bf16.msra.mxu0 %v1636
        %2399 = vmatpush.bf16.msra.mxu0 %v1632
        %2400 = vmatpush.bf16.msra.mxu0 %v1628
        %2401 = vmatpush.bf16.msra.mxu0 %v1624
        %2402 = vmatmul.bf16.gmra.mxu0 %v520
        %v2403 = vpop.f32.mrf.mxu0
        %v2404 = vadd.f32 %v2386, %v2403
        %v2405 = vpop.f32.mrf.mxu0
        %v2406 = vadd.f32 %v2388, %v2405
        %2407 = vmatmul.bf16.gmra.mxu0 %v528
        %v2408 = vpop.f32.mrf.mxu0
        %v2409 = vadd.f32 %v2391, %v2408
        %v2410 = vpop.f32.mrf.mxu0
        %2411 = vdwg.mxu0
        %2412 = vmatpush.bf16.msra.mxu0 %v1684
        %2413 = vmatpush.bf16.msra.mxu0 %v1680
        %2414 = vmatpush.bf16.msra.mxu0 %v1676
        %2415 = vmatpush.bf16.msra.mxu0 %v1672
        %2416 = vmatpush.bf16.msra.mxu0 %v1668
        %2417 = vmatpush.bf16.msra.mxu0 %v1664
        %2418 = vmatpush.bf16.msra.mxu0 %v1660
        %2419 = vmatpush.bf16.msra.mxu0 %v1656
        %2420 = vmatmul.bf16.gmra.mxu0 %v521
        %v2421 = vpop.f32.mrf.mxu0
        %v2422 = vadd.f32 %v2404, %v2421
        %v2423 = vpop.f32.mrf.mxu0
        %v2424 = vadd.f32 %v2406, %v2423
        %2425 = vmatmul.bf16.gmra.mxu0 %v529
        %v2426 = vpop.f32.mrf.mxu0
        %v2427 = vadd.f32 %v2409, %v2426
        %v2428 = vpop.f32.mrf.mxu0
        %2429 = vdwg.mxu0
        %2430 = vmatpush.bf16.msra.mxu0 %v1716
        %2431 = vmatpush.bf16.msra.mxu0 %v1712
        %2432 = vmatpush.bf16.msra.mxu0 %v1708
        %2433 = vmatpush.bf16.msra.mxu0 %v1704
        %2434 = vmatpush.bf16.msra.mxu0 %v1700
        %2435 = vmatpush.bf16.msra.mxu0 %v1696
        %2436 = vmatpush.bf16.msra.mxu0 %v1692
        %2437 = vmatpush.bf16.msra.mxu0 %v1688
        %2438 = vmatmul.bf16.gmra.mxu0 %v522
        %v2439 = vpop.f32.mrf.mxu0
        %v2440 = vadd.f32 %v2422, %v2439
        %v2441 = vpop.f32.mrf.mxu0
        %v2442 = vadd.f32 %v2424, %v2441
        %2443 = vmatmul.bf16.gmra.mxu0 %v530
        %v2444 = vpop.f32.mrf.mxu0
        %v2445 = vadd.f32 %v2427, %v2444
        %v2446 = vpop.f32.mrf.mxu0
        %2447 = vdwg.mxu0
        %2448 = vmatpush.bf16.msra.mxu0 %v1748
        %2449 = vmatpush.bf16.msra.mxu0 %v1744
        %2450 = vmatpush.bf16.msra.mxu0 %v1740
        %2451 = vmatpush.bf16.msra.mxu0 %v1736
        %2452 = vmatpush.bf16.msra.mxu0 %v1732
        %2453 = vmatpush.bf16.msra.mxu0 %v1728
        %2454 = vmatpush.bf16.msra.mxu0 %v1724
        %2455 = vmatpush.bf16.msra.mxu0 %v1720
        %2456 = vmatmul.bf16.gmra.mxu0 %v523
        %v2457 = vpop.f32.mrf.mxu0
        %v2458 = vadd.f32 %v2440, %v2457
        %v2459 = vpop.f32.mrf.mxu0
        %v2460 = vadd.f32 %v2442, %v2459
        %2461 = vmatmul.bf16.gmra.mxu0 %v531
        %v2462 = vpop.f32.mrf.mxu0
        %v2463 = vadd.f32 %v2445, %v2462
        %v2464 = vpop.f32.mrf.mxu0
        %2465 = vdwg.mxu0
        %2466 = vmatpush.bf16.msra.mxu0 %v1780
        %2467 = vmatpush.bf16.msra.mxu0 %v1776
        %2468 = vmatpush.bf16.msra.mxu0 %v1772
        %2469 = vmatpush.bf16.msra.mxu0 %v1768
        %2470 = vmatpush.bf16.msra.mxu0 %v1764
        %2471 = vmatpush.bf16.msra.mxu0 %v1760
        %2472 = vmatpush.bf16.msra.mxu0 %v1756
        %2473 = vmatpush.bf16.msra.mxu0 %v1752
        %2474 = vmatmul.bf16.gmra.mxu0 %v524
        %v2475 = vpop.f32.mrf.mxu0
        %v2476 = vadd.f32 %v2458, %v2475
        %v2477 = vpop.f32.mrf.mxu0
        %v2478 = vadd.f32 %v2460, %v2477
        %2479 = vmatmul.bf16.gmra.mxu0 %v532
        %v2480 = vpop.f32.mrf.mxu0
        %v2481 = vadd.f32 %v2463, %v2480
        %v2482 = vpop.f32.mrf.mxu0
        %2483 = vdwg.mxu0
        %2484 = vmatpush.bf16.msra.mxu0 %v1812
        %2485 = vmatpush.bf16.msra.mxu0 %v1808
        %2486 = vmatpush.bf16.msra.mxu0 %v1804
        %2487 = vmatpush.bf16.msra.mxu0 %v1800
        %2488 = vmatpush.bf16.msra.mxu0 %v1796
        %2489 = vmatpush.bf16.msra.mxu0 %v1792
        %2490 = vmatpush.bf16.msra.mxu0 %v1788
        %2491 = vmatpush.bf16.msra.mxu0 %v1784
        %2492 = vmatmul.bf16.gmra.mxu0 %v525
        %v2493 = vpop.f32.mrf.mxu0
        %v2494 = vadd.f32 %v2476, %v2493
        %v2495 = vpop.f32.mrf.mxu0
        %v2496 = vadd.f32 %v2478, %v2495
        %2497 = vmatmul.bf16.gmra.mxu0 %v533
        %v2498 = vpop.f32.mrf.mxu0
        %v2499 = vadd.f32 %v2481, %v2498
        %v2500 = vpop.f32.mrf.mxu0
        %2501 = vdwg.mxu0
        %2502 = vmatpush.bf16.msra.mxu0 %v1589
        %2503 = vmatpush.bf16.msra.mxu0 %v1585
        %2504 = vmatpush.bf16.msra.mxu0 %v1581
        %2505 = vmatpush.bf16.msra.mxu0 %v1577
        %2506 = vmatpush.bf16.msra.mxu0 %v1573
        %2507 = vmatpush.bf16.msra.mxu0 %v1569
        %2508 = vmatpush.bf16.msra.mxu0 %v1565
        %2509 = vmatpush.bf16.msra.mxu0 %v1561
        %2510 = vmatmul.bf16.gmra.mxu0 %v518
        %v2511 = vpop.f32.mrf.mxu0
        %v2512 = vadd.f32 0.0, %v2511
        %v2513 = vpop.f32.mrf.mxu0
        %v2514 = vadd.f32 0.0, %v2513
        %2515 = vmatmul.bf16.gmra.mxu0 %v526
        %v2516 = vpop.f32.mrf.mxu0
        %v2517 = vadd.f32 0.0, %v2516
        %v2518 = vpop.f32.mrf.mxu0
        %2519 = vdwg.mxu0
        %2520 = vmatpush.bf16.msra.mxu0 %v1621
        %2521 = vmatpush.bf16.msra.mxu0 %v1617
        %2522 = vmatpush.bf16.msra.mxu0 %v1613
        %2523 = vmatpush.bf16.msra.mxu0 %v1609
        %2524 = vmatpush.bf16.msra.mxu0 %v1605
        %2525 = vmatpush.bf16.msra.mxu0 %v1601
        %2526 = vmatpush.bf16.msra.mxu0 %v1597
        %2527 = vmatpush.bf16.msra.mxu0 %v1593
        %2528 = vmatmul.bf16.gmra.mxu0 %v519
        %v2529 = vpop.f32.mrf.mxu0
        %v2530 = vadd.f32 %v2512, %v2529
        %v2531 = vpop.f32.mrf.mxu0
        %v2532 = vadd.f32 %v2514, %v2531
        %2533 = vmatmul.bf16.gmra.mxu0 %v527
        %v2534 = vpop.f32.mrf.mxu0
        %v2535 = vadd.f32 %v2517, %v2534
        %v2536 = vpop.f32.mrf.mxu0
        %2537 = vdwg.mxu0
        %2538 = vmatpush.bf16.msra.mxu0 %v1653
        %2539 = vmatpush.bf16.msra.mxu0 %v1649
        %2540 = vmatpush.bf16.msra.mxu0 %v1645
        %2541 = vmatpush.bf16.msra.mxu0 %v1641
        %2542 = vmatpush.bf16.msra.mxu0 %v1637
        %2543 = vmatpush.bf16.msra.mxu0 %v1633
        %2544 = vmatpush.bf16.msra.mxu0 %v1629
        %2545 = vmatpush.bf16.msra.mxu0 %v1625
        %2546 = vmatmul.bf16.gmra.mxu0 %v520
        %v2547 = vpop.f32.mrf.mxu0
        %v2548 = vadd.f32 %v2530, %v2547
        %v2549 = vpop.f32.mrf.mxu0
        %v2550 = vadd.f32 %v2532, %v2549
        %2551 = vmatmul.bf16.gmra.mxu0 %v528
        %v2552 = vpop.f32.mrf.mxu0
        %v2553 = vadd.f32 %v2535, %v2552
        %v2554 = vpop.f32.mrf.mxu0
        %2555 = vdwg.mxu0
        %2556 = vmatpush.bf16.msra.mxu0 %v1685
        %2557 = vmatpush.bf16.msra.mxu0 %v1681
        %2558 = vmatpush.bf16.msra.mxu0 %v1677
        %2559 = vmatpush.bf16.msra.mxu0 %v1673
        %2560 = vmatpush.bf16.msra.mxu0 %v1669
        %2561 = vmatpush.bf16.msra.mxu0 %v1665
        %2562 = vmatpush.bf16.msra.mxu0 %v1661
        %2563 = vmatpush.bf16.msra.mxu0 %v1657
        %2564 = vmatmul.bf16.gmra.mxu0 %v521
        %v2565 = vpop.f32.mrf.mxu0
        %v2566 = vadd.f32 %v2548, %v2565
        %v2567 = vpop.f32.mrf.mxu0
        %v2568 = vadd.f32 %v2550, %v2567
        %2569 = vmatmul.bf16.gmra.mxu0 %v529
        %v2570 = vpop.f32.mrf.mxu0
        %v2571 = vadd.f32 %v2553, %v2570
        %v2572 = vpop.f32.mrf.mxu0
        %2573 = vdwg.mxu0
        %2574 = vmatpush.bf16.msra.mxu0 %v1717
        %2575 = vmatpush.bf16.msra.mxu0 %v1713
        %2576 = vmatpush.bf16.msra.mxu0 %v1709
        %2577 = vmatpush.bf16.msra.mxu0 %v1705
        %2578 = vmatpush.bf16.msra.mxu0 %v1701
        %2579 = vmatpush.bf16.msra.mxu0 %v1697
        %2580 = vmatpush.bf16.msra.mxu0 %v1693
        %2581 = vmatpush.bf16.msra.mxu0 %v1689
        %2582 = vmatmul.bf16.gmra.mxu0 %v522
        %v2583 = vpop.f32.mrf.mxu0
        %v2584 = vadd.f32 %v2566, %v2583
        %v2585 = vpop.f32.mrf.mxu0
        %v2586 = vadd.f32 %v2568, %v2585
        %2587 = vmatmul.bf16.gmra.mxu0 %v530
        %v2588 = vpop.f32.mrf.mxu0
        %v2589 = vadd.f32 %v2571, %v2588
        %v2590 = vpop.f32.mrf.mxu0
        %2591 = vdwg.mxu0
        %2592 = vmatpush.bf16.msra.mxu0 %v1749
        %2593 = vmatpush.bf16.msra.mxu0 %v1745
        %2594 = vmatpush.bf16.msra.mxu0 %v1741
        %2595 = vmatpush.bf16.msra.mxu0 %v1737
        %2596 = vmatpush.bf16.msra.mxu0 %v1733
        %2597 = vmatpush.bf16.msra.mxu0 %v1729
        %2598 = vmatpush.bf16.msra.mxu0 %v1725
        %2599 = vmatpush.bf16.msra.mxu0 %v1721
        %2600 = vmatmul.bf16.gmra.mxu0 %v523
        %v2601 = vpop.f32.mrf.mxu0
        %v2602 = vadd.f32 %v2584, %v2601
        %v2603 = vpop.f32.mrf.mxu0
        %v2604 = vadd.f32 %v2586, %v2603
        %2605 = vmatmul.bf16.gmra.mxu0 %v531
        %v2606 = vpop.f32.mrf.mxu0
        %v2607 = vadd.f32 %v2589, %v2606
        %v2608 = vpop.f32.mrf.mxu0
        %2609 = vdwg.mxu0
        %2610 = vmatpush.bf16.msra.mxu0 %v1781
        %2611 = vmatpush.bf16.msra.mxu0 %v1777
        %2612 = vmatpush.bf16.msra.mxu0 %v1773
        %2613 = vmatpush.bf16.msra.mxu0 %v1769
        %2614 = vmatpush.bf16.msra.mxu0 %v1765
        %2615 = vmatpush.bf16.msra.mxu0 %v1761
        %2616 = vmatpush.bf16.msra.mxu0 %v1757
        %2617 = vmatpush.bf16.msra.mxu0 %v1753
        %2618 = vmatmul.bf16.gmra.mxu0 %v524
        %v2619 = vpop.f32.mrf.mxu0
        %v2620 = vadd.f32 %v2602, %v2619
        %v2621 = vpop.f32.mrf.mxu0
        %v2622 = vadd.f32 %v2604, %v2621
        %2623 = vmatmul.bf16.gmra.mxu0 %v532
        %v2624 = vpop.f32.mrf.mxu0
        %v2625 = vadd.f32 %v2607, %v2624
        %v2626 = vpop.f32.mrf.mxu0
        %2627 = vdwg.mxu0
        %2628 = vmatpush.bf16.msra.mxu0 %v1813
        %2629 = vmatpush.bf16.msra.mxu0 %v1809
        %2630 = vmatpush.bf16.msra.mxu0 %v1805
        %2631 = vmatpush.bf16.msra.mxu0 %v1801
        %2632 = vmatpush.bf16.msra.mxu0 %v1797
        %2633 = vmatpush.bf16.msra.mxu0 %v1793
        %2634 = vmatpush.bf16.msra.mxu0 %v1789
        %2635 = vmatpush.bf16.msra.mxu0 %v1785
        %2636 = vmatmul.bf16.gmra.mxu0 %v525
        %v2637 = vpop.f32.mrf.mxu0
        %v2638 = vadd.f32 %v2620, %v2637
        %v2639 = vpop.f32.mrf.mxu0
        %v2640 = vadd.f32 %v2622, %v2639
        %2641 = vmatmul.bf16.gmra.mxu0 %v533
        %v2642 = vpop.f32.mrf.mxu0
        %v2643 = vadd.f32 %v2625, %v2642
        %v2644 = vpop.f32.mrf.mxu0
        %2645 = vdwg.mxu0
        %v2646 = vadd.f32 %v506, %v2206
        %v2647 = vadd.f32 %v507, %v2350
        %v2648 = vadd.f32 %v508, %v2494
        %v2649 = vadd.f32 %v509, %v2638
        %v2650 = vadd.f32 %v510, %v2208
        %v2651 = vadd.f32 %v511, %v2352
        %v2652 = vadd.f32 %v512, %v2496
        %v2653 = vadd.f32 %v513, %v2640
        %v2654 = vadd.f32 %v514, %v2211
        %v2655 = vadd.f32 %v515, %v2355
        %v2656 = vadd.f32 %v516, %v2499
        %v2657 = vadd.f32 %v517, %v2643
        %2658 = vst [vmem:[#allocation2] sm:$0xff] %v2646
        %2659 = vst [vmem:[#allocation2 + $0x8] sm:$0xff] %v2647
        %2660 = vst [vmem:[#allocation2 + $0x10] sm:$0xff] %v2648
        %2661 = vst [vmem:[#allocation2 + $0x18] sm:$0xff] %v2649
        %2662 = vst [vmem:[#allocation2 + $0x20] sm:$0xff] %v2650
        %2663 = vst [vmem:[#allocation2 + $0x28] sm:$0xff] %v2651
        %2664 = vst [vmem:[#allocation2 + $0x30] sm:$0xff] %v2652
        %2665 = vst [vmem:[#allocation2 + $0x38] sm:$0xff] %v2653
        %2666 = vst [vmem:[#allocation2 + $0x40] sm:$0xff] %v2654
        %2667 = vst [vmem:[#allocation2 + $0x48] sm:$0xff] %v2655
        %2668 = vst [vmem:[#allocation2 + $0x50] sm:$0xff] %v2656
        %2669 = vst [vmem:[#allocation2 + $0x58] sm:$0xff] %v2657
        %p2670 = scmp.eq.s32.totalorder %s20, 3
        // Predicated region
        $region64: #{fourier_avg_pool_3d.1} parent=54 // pred_check
          %p2671 = pneg %p2670
        $region65: #{fourier_avg_pool_3d.1} parent=54 // pred_check_branch
          %2673 = sbr.rel (%p2671) target = $region67
        $region66: #{fourier_avg_pool_3d.1} parent=54 // pred_region
          %v2674 = vld [vmem:[%s2] sm:$0xf]
          %v2675 = vld [vmem:[%s2 + $0x4] sm:$0xf]
          %v2676 = vld [vmem:[#allocation2] sm:$0xff]
          %v2677 = vld [vmem:[#allocation2 + $0x8] sm:$0xff]
          %v2678 = vld [vmem:[#allocation2 + $0x10] sm:$0xff]
          %v2679 = vld [vmem:[#allocation2 + $0x18] sm:$0xff]
          %v2680 = vld [vmem:[#allocation2 + $0x20] sm:$0xff]
          %v2681 = vld [vmem:[#allocation2 + $0x28] sm:$0xff]
          %v2682 = vld [vmem:[#allocation2 + $0x30] sm:$0xff]
          %v2683 = vld [vmem:[#allocation2 + $0x38] sm:$0xff]
          %v2684 = vld [vmem:[#allocation2 + $0x40] sm:$0xff]
          %v2685 = vld [vmem:[#allocation2 + $0x48] sm:$0xff]
          %v2686 = vld [vmem:[#allocation2 + $0x50] sm:$0xff]
          %v2687 = vld [vmem:[#allocation2 + $0x58] sm:$0xff]
          %v2688 = vpack.c.bf16 %v2680, %v2676
          %v2689 = vpack.c.bf16 %v2681, %v2677
          %v2690 = vpack.c.bf16 %v2682, %v2678
          %v2691 = vpack.c.bf16 %v2683, %v2679
          %v2692 = vpack.c.bf16 %v2684, %v2684
          %v2693 = vpack.c.bf16 %v2685, %v2685
          %v2694 = vpack.c.bf16 %v2686, %v2686
          %v2695 = vpack.c.bf16 %v2687, %v2687
          %v2698 = vunpack.c.l.b16 %v2674
          %v2699 = vunpack.c.l.b16 %v2675
          %v2700 = vpack.c.b16 %v2699, %v2698
          %vm2701 = vcmask 195584
          %v2703 = vsel %vm2701, %v2700, 0
          %vm2705 = vcmask 1043456
          %v2707 = vsel %vm2705, %v2692, 0
          %v2710 = vsel %vm2705, %v2693, 0
          %v2713 = vsel %vm2705, %v2694, 0
          %v2716 = vsel %vm2705, %v2695, 0
          %2718 = vmatpush.bf16.msra.mxu0 0
          %2719 = vmatpush.bf16.msra.mxu0 0
          %2720 = vmatpush.bf16.msra.mxu0 0
          %2721 = vmatpush.bf16.msra.mxu0 0
          %2722 = vmatpush.bf16.msra.mxu0 0
          %2723 = vmatpush.bf16.msra.mxu0 0
          %2724 = vmatpush.bf16.msra.mxu0 %v2707
          %2725 = vmatpush.bf16.msra.mxu0 %v2688
          %2726 = vmatmul.bf16.gmra.mxu0 %v2703
          %v2727 = vpop.f32.mrf.mxu0
          %v2728 = vadd.f32 0.0, %v2727
          %v2729 = vpop.f32.mrf.mxu0
          %v2730 = vadd.f32 0.0, %v2729
          %2731 = vdwg.mxu0
          %2732 = vmatpush.bf16.msra.mxu0 0
          %2733 = vmatpush.bf16.msra.mxu0 0
          %2734 = vmatpush.bf16.msra.mxu0 0
          %2735 = vmatpush.bf16.msra.mxu0 0
          %2736 = vmatpush.bf16.msra.mxu0 0
          %2737 = vmatpush.bf16.msra.mxu0 0
          %2738 = vmatpush.bf16.msra.mxu0 %v2710
          %2739 = vmatpush.bf16.msra.mxu0 %v2689
          %2740 = vmatmul.bf16.gmra.mxu0 %v2703
          %v2741 = vpop.f32.mrf.mxu0
          %v2742 = vadd.f32 0.0, %v2741
          %v2743 = vpop.f32.mrf.mxu0
          %v2744 = vadd.f32 0.0, %v2743
          %2745 = vdwg.mxu0
          %2746 = vmatpush.bf16.msra.mxu0 0
          %2747 = vmatpush.bf16.msra.mxu0 0
          %2748 = vmatpush.bf16.msra.mxu0 0
          %2749 = vmatpush.bf16.msra.mxu0 0
          %2750 = vmatpush.bf16.msra.mxu0 0
          %2751 = vmatpush.bf16.msra.mxu0 0
          %2752 = vmatpush.bf16.msra.mxu0 %v2713
          %2753 = vmatpush.bf16.msra.mxu0 %v2690
          %2754 = vmatmul.bf16.gmra.mxu0 %v2703
          %v2755 = vpop.f32.mrf.mxu0
          %v2756 = vadd.f32 0.0, %v2755
          %v2757 = vpop.f32.mrf.mxu0
          %v2758 = vadd.f32 0.0, %v2757
          %2759 = vdwg.mxu0
          %2760 = vmatpush.bf16.msra.mxu0 0
          %2761 = vmatpush.bf16.msra.mxu0 0
          %2762 = vmatpush.bf16.msra.mxu0 0
          %2763 = vmatpush.bf16.msra.mxu0 0
          %2764 = vmatpush.bf16.msra.mxu0 0
          %2765 = vmatpush.bf16.msra.mxu0 0
          %2766 = vmatpush.bf16.msra.mxu0 %v2716
          %2767 = vmatpush.bf16.msra.mxu0 %v2691
          %2768 = vmatmul.bf16.gmra.mxu0 %v2703
          %v2769 = vpop.f32.mrf.mxu0
          %v2770 = vadd.f32 0.0, %v2769
          %v2771 = vpop.f32.mrf.mxu0
          %v2772 = vadd.f32 0.0, %v2771
          %2773 = vdwg.mxu0
          %2774 = vst [vmem:[%s277] sm:$0xff] %v2728
          %2775 = vst [vmem:[%s277 + $0x8] sm:$0xff] %v2742
          %2776 = vst [vmem:[%s277 + $0x10] sm:$0xff] %v2756
          %2777 = vst [vmem:[%s277 + $0x18] sm:$0xff] %v2770
          %2778 = vst [vmem:[%s277 + $0x20] sm:$0xff] %v2730
          %2779 = vst [vmem:[%s277 + $0x28] sm:$0xff] %v2744
          %2780 = vst [vmem:[%s277 + $0x30] sm:$0xff] %v2758
          %2781 = vst [vmem:[%s277 + $0x38] sm:$0xff] %v2772
        $region67: #{fourier_avg_pool_3d.1} parent=54 // pred_fallthru
          _
        %s2782 = smul.u32 2, %s19
        %p2783 = scmp.lt.s32.totalorder %s2782, 3
        %s2784 = scalar_select %p2783, %s2782, 3
        %s2785 = smul.addr %s2784, 4
        %s2786 = smul.addr %s2785, 8
        %s2787 = scalar_lea.vmem %s4, %s2786
        // Predicated region
        $region68: #{fourier_avg_pool_3d.1} parent=54 // pred_check
          %p2788 = pneg %p141
        $region69: #{fourier_avg_pool_3d.1} parent=54 // pred_check_branch
          %2790 = sbr.rel (%p2788) target = $region71
        $region70: #{fourier_avg_pool_3d.1} parent=54 // pred_region
          %s2791 = smul.u32 2, %s19
        $region71: #{fourier_avg_pool_3d.1} parent=54 // pred_fallthru
          _
      $region55: #{fourier_avg_pool_3d.1} parent=5 // pred_fallthru
        _
      %p2792 = scmp.le.s32.totalorder 2, %s10
      // Predicated region
      $region72: #{fourier_avg_pool_3d.1} parent=5 // pred_check
        %p2793 = pneg %p2792
      $region73: #{fourier_avg_pool_3d.1} parent=5 // pred_check_branch
        %2795 = sbr.rel (%p2793) target = $region75
      $region74: #{fourier_avg_pool_3d.1} parent=5 // pred_region
        %s2796 = ssub.s32 %s10, 2
        // Predicated region
        $region76: #{fourier_avg_pool_3d.1} parent=74 // pred_check
          %p2797 = pneg %p147
        $region77: #{fourier_avg_pool_3d.1} parent=74 // pred_check_branch
          %2799 = sbr.rel (%p2797) target = $region79
        $region78: #{fourier_avg_pool_3d.1} parent=74 // pred_region
          %s2800 = smul.u32 2, %s21
          %p2801 = scmp.lt.s32.totalorder %s2800, 3
          %s2802 = scalar_select %p2801, %s2800, 3
          %s2803 = smul.addr %s2802, 4
          %s2804 = smul.addr %s2803, 8
          %s2805 = scalar_lea.vmem %s4, %s2804
        $region79: #{fourier_avg_pool_3d.1} parent=74 // pred_fallthru
          _
      $region75: #{fourier_avg_pool_3d.1} parent=5 // pred_fallthru
        _
    $region6: #{fourier_avg_pool_3d.1} parent=1 // loop_footer
      %s14 = sadd.s32 1, %s10
    $region7: #{fourier_avg_pool_3d.1} parent=1 // loop_footer_branch
      %9 = sbr.rel target = $region3
    $region8: #{fourier_avg_pool_3d.1} parent=1 // loop_exit
      _

</llo_original>
